<compile_context>
chip_gen: v7x
topology: tpu7x:2x2x1
jax: 0.10.0
libtpu: 0.0.40
codegen_flags: <defaults>
</compile_context>

<pallas_src>
import functools
import math

import jax
import jax.numpy as jnp
import numpy as np
from jax.experimental import pallas as pl
from jax.experimental.pallas import tpu as pltpu

MXU_DTYPE = jnp.bfloat16     # MXU operand dtype; accumulation/epilogue stay f32
LANE = 128


# ------------------------------ small helpers ---------------------------------

def closest_factors(n):
    factor = int(n ** 0.5)
    while n % factor != 0:
        factor -= 1
    return (max(factor, n // factor), min(factor, n // factor))


def _round_up(x, m):
    return ((x + m - 1) // m) * m


def _output_packing(C):
    """How many output frames fit in one 128-lane f32 output row (no lane padding)."""
    if C < LANE and LANE % C == 0:
        return LANE // C, C                    # FPR frames per row, Cop = per-frame width
    return 1, _round_up(C, LANE)               # fall back to channel padding


def _vmem_limit_bytes():
    """Generation-aware VMEM grant (v5e/v6e: 128 MiB physical, v7x: 64 MiB)."""
    try:
        cap = int(pltpu.get_tpu_info().vmem_capacity_bytes)
    except Exception:
        cap = 64 * 2 ** 20                     # conservative (v7x-sized) fallback
    return max(32 * 2 ** 20, (cap * 3) // 4)


def _choose_time_tile(B, T2, F2, C, Kpad, Cop, FPR, vmem_limit):
    """Pick TT2 (output time frames per grid step), aligned with the VMEM grant.

    Counts input+output double buffers, resident weights and the f32 GEMM intermediates.
    TT2 is a multiple of max(16, 8*FPR): 16 for bf16 (16,128) vregs, 8*FPR so the packed
    output block keeps >= 8 sublanes.  Clamped to the (rounded) real time extent so no
    fully-padded tail tile is ever scheduled, and shrunk if needed so both v7x TCs get work.
    """
    align = max(16, 8 * FPR)
    Cw = FPR * Cop
    lane = lambda n: _round_up(n, LANE)
    weight_bytes = 2 * (Kpad * lane(9 * C) * 2          # block-diag conv1 weight (bf16)
                        + 9 * C * lane(C) * 2           # conv2 weight
                        + F2 * FPR * C * Cw * 2         # wide linear weight
                        + (lane(9 * C) + lane(C) + Cw) * 4)   # biases (f32)
    bytes_per_t2 = (2 * F2 * lane(Kpad) * 2             # fused input, double buffered (bf16)
                    + 2 * Cw * 4 // FPR                 # packed output, double buffered (f32)
                    + F2 * lane(9 * C) * (4 + 2)        # conv1 act f32 + bf16 recast
                    + F2 * lane(C) * (4 + 2))           # conv2 act f32 + bf16 recast
    budget = max(vmem_limit - weight_bytes - (8 << 20), 4 << 20)
    tt2 = max(align, (budget // bytes_per_t2 // align) * align)
    tt2 = min(tt2, _round_up(T2, align))                # never tile past the real extent
    if B * (_round_up(T2, tt2) // tt2) < 2 and tt2 > align:
        tt2 = max(align, _round_up(-(-T2 // 2), align)) # keep >=2 blocks for 2 TCs (v7x)
    return int(tt2)


# ------------------------------- Pallas kernel ---------------------------------

def _fused_subsample_kernel(xp_ref, wu_ref, w2_ref, w3_ref, b1_ref, b2_ref, b3_ref,
                            o_ref, *, F2, TT2, FPR):
    """conv1 -> ReLU -> conv2 -> ReLU -> Linear for one (batch, time-tile) block.

    Rows of every GEMM are ordered (f2, j, r) with t_local = r*FPR + j, so the linear
    stage can emit FPR packed output frames per 128-lane row using only contiguous
    row slices; no intermediate ever leaves VMEM/vregs.
    """
    f32 = jnp.float32
    M = F2 * TT2
    R = TT2 // FPR
    Kpad = xp_ref.shape[-1]

    # conv1: all 3 conv2 time taps fused through one block-diagonal weight -> ReLU
    xcat = xp_ref[...].reshape(M, Kpad)                                     # (M, Kpad) bf16
    u = jnp.dot(xcat, wu_ref[...], preferred_element_type=f32)              # (M, 9C)
    u = jnp.maximum(u + b1_ref[...], 0.0)

    # conv2: a single 9C-deep contraction -> ReLU (kept f32 so row slices stay aligned)
    h2 = jnp.dot(u.astype(xcat.dtype), w2_ref[...], preferred_element_type=f32)  # (M, C)
    h2 = jnp.maximum(h2 + b2_ref[...], 0.0)

    # Linear: weight block (f2, j) is pre-placed at lane offset j*Cop, so plain GEMMs
    # accumulate directly into the packed (R, FPR*Cop) output row layout.
    y = jnp.zeros((R, o_ref.shape[-1]), f32)
    for j in range(FPR):
        for f2 in range(F2):
            base = f2 * TT2 + j * R
            y = y + jnp.dot(h2[base:base + R, :].astype(xcat.dtype), w3_ref[f2, j],
                            preferred_element_type=f32)
    y = y + b3_ref[...]
    o_ref[...] = y.reshape(o_ref.shape).astype(o_ref.dtype)                 # lane-dense store


# ------------------------- parameter init / packing ----------------------------

def init_params(key, input_dim, output_dim, feature_stride):
    """Deterministic synthetic parameters (PyTorch-style uniform fan-in init)."""
    fstride1, fstride2 = closest_factors(feature_stride)
    C = output_dim
    F1 = (input_dim - 3) // fstride1 + 1
    F2 = (F1 - 3) // fstride2 + 1
    conv_out_dim = C * F2
    mF2 = (((input_dim - 2) // fstride1 + 1) - 2) // fstride2 + 1
    assert mF2 == F2, (mF2, F2)          # module's conv_out_dim formula must agree
    ks = jax.random.split(key, 6)

    def u(k, shape, fan_in):
        bound = 1.0 / math.sqrt(fan_in)
        return jax.random.uniform(k, shape, jnp.float32, -bound, bound)

    return dict(
        w1=u(ks[0], (3, 3, C), 9),               # (kh, kw, cout), Cin = 1
        b1=u(ks[1], (C,), 9),
        w2=u(ks[2], (3, 3, C, C), 9 * C),        # (kh, kw, cin, cout)
        b2=u(ks[3], (C,), 9 * C),
        w3=u(ks[4], (conv_out_dim, C), conv_out_dim),   # y = h @ w3, rows = c*F2 + f2
        b3=u(ks[5], (C,), conv_out_dim),
    )


def pack_params(params, *, fstride1, F2):
    """Fold conv windows into GEMM weights; pre-place the Linear in the packed layout."""
    C = params["b1"].shape[0]
    Cout = params["b3"].shape[0]
    Wf = 2 * fstride1 + 3
    K1 = 3 * Wf
    Kpad = _round_up(3 * K1, 64)
    FPR, Cop = _output_packing(Cout)
    Cw = FPR * Cop

    # conv1 dense weight (one tap): wu[ki*Wf + fstride1*kj + kjj, kj*C + c] = w1[ki,kjj,c]
    w1 = np.asarray(params["w1"], np.float32)
    wu = np.zeros((K1, 3 * C), np.float32)
    for ki in range(3):
        for kj in range(3):
            for kjj in range(3):
                wu[ki * Wf + fstride1 * kj + kjj, kj * C:(kj + 1) * C] = w1[ki, kjj, :]
    # block-diagonal over the 3 conv2 time taps -> ONE conv1 GEMM of depth Kpad
    wu_bd = np.zeros((Kpad, 9 * C), np.float32)
    for a in range(3):
        wu_bd[a * K1:(a + 1) * K1, a * 3 * C:(a + 1) * 3 * C] = wu

    # conv2 weight as ONE 9C-deep contraction: rows (a, kj, cin), cols cout.
    w2cat = np.asarray(params["w2"], np.float32).reshape(9 * C, C)

    # Linear weight: PyTorch flattening is (c*F2 + f2); permute to (f2, c, out) and place
    # block (f2, j) at lane offset j*Cop so the kernel writes the packed row directly.
    w3 = np.asarray(params["w3"], np.float32)                    # (C*F2, Cout)
    w3p = w3.reshape(C, F2, Cout).transpose(1, 0, 2)             # (F2, C, Cout)
    w3w = np.zeros((F2, FPR, C, Cw), np.float32)
    b3w = np.zeros((Cw,), np.float32)
    for j in range(FPR):
        w3w[:, j, :, j * Cop:j * Cop + Cout] = w3p
        b3w[j * Cop:j * Cop + Cout] = np.asarray(params["b3"], np.float32)

    return dict(
        wu_bd=jnp.asarray(wu_bd, MXU_DTYPE),
        w2cat=jnp.asarray(w2cat, MXU_DTYPE),
        w3w=jnp.asarray(w3w, MXU_DTYPE),
        b1t=jnp.tile(jnp.asarray(params["b1"], jnp.float32), 9).reshape(1, 9 * C),
        b2=jnp.asarray(params["b2"], jnp.float32).reshape(1, C),
        b3w=jnp.asarray(b3w, jnp.float32).reshape(1, Cw),
    )


# ------------------------------- host-side prep --------------------------------

def _prep_input(x, *, tstride1, tstride2, fstride1, fstride2, T2, F2, TT2, FPR, Kpad):
    """One fused patch extraction producing the concatenated, lane-padded conv operand.

    xp[b, f2, local, a*K1 + ki*Wf + p] = x[b, tdf*t2 + tstride1*a + ki, fdf*f2 + p]
    with local = j*R + r and t2 = tile*TT2 + r*FPR + j (per-tile deinterleave, so the
    kernel can pack FPR output frames per 128-lane row without any in-kernel relayout).
    """
    B, T, D = x.shape
    tdf, fdf = tstride1 * tstride2, fstride1 * fstride2
    Wf = 2 * fstride1 + 3
    K1 = 3 * Wf
    WT = 2 * tstride1 + 3
    T2pad = _round_up(T2, TT2)
    ntiles = T2pad // TT2
    R = TT2 // FPR

    patches = jax.lax.conv_general_dilated_patches(
        x[:, None, :, :].astype(jnp.float32),
        filter_shape=(WT, Wf), window_strides=(tdf, fdf), padding="VALID",
        dimension_numbers=("NCHW", "OIHW", "NCHW"))              # (B, WT*Wf, T2a, F2a)

    idx = np.empty((3 * K1,), np.int32)                          # (a, ki, p) -> patch chan
    for a in range(3):
        for ki in range(3):
            for p in range(Wf):
                idx[a * K1 + ki * Wf + p] = (tstride1 * a + ki) * Wf + p
    xp = jnp.take(patches, jnp.asarray(idx), axis=1)             # (B, 3*K1, T2a, F2a)
    xp = xp[:, :, :T2, :F2].astype(MXU_DTYPE)                    # cast before transpose/pad
    xp = jnp.transpose(xp, (0, 3, 2, 1))                         # (B, F2, T2, 3*K1)
    xp = jnp.pad(xp, ((0, 0), (0, 0), (0, T2pad - T2), (0, Kpad - 3 * K1)))
    # per-tile (r, j) -> (j, r) deinterleave of the time axis
    xp = xp.reshape(B, F2, ntiles, R, FPR, Kpad)
    xp = jnp.transpose(xp, (0, 1, 2, 4, 3, 5)).reshape(B, F2, T2pad, Kpad)
    return xp


# --------------------------------- forward -------------------------------------

def speech_embedding_forward(packed, x, x_len, *, time_stride, feature_stride,
                             input_dim, output_dim):
    """Equivalent of SpeechEmbedding.forward(x, x_len, use_blstm=False)."""
    tstride1, tstride2 = closest_factors(time_stride)
    fstride1, fstride2 = closest_factors(feature_stride)
    B, T, D = x.shape
    assert D == input_dim
    C = output_dim
    T1 = (T - 3) // tstride1 + 1
    T2 = (T1 - 3) // tstride2 + 1
    F1 = (D - 3) // fstride1 + 1
    F2 = (F1 - 3) // fstride2 + 1
    Wf = 2 * fstride1 + 3
    K1 = 3 * Wf
    Kpad = _round_up(3 * K1, 64)
    FPR, Cop = _output_packing(C)
    Cw = FPR * Cop

    vmem_limit = _vmem_limit_bytes()
    TT2 = _choose_time_tile(B, T2, F2, C, Kpad, Cop, FPR, vmem_limit)
    T2pad = _round_up(T2, TT2)
    ntiles = T2pad // TT2
    R = TT2 // FPR
    grid = (B, ntiles)

    xp = _prep_input(x, tstride1=tstride1, tstride2=tstride2,
                     fstride1=fstride1, fstride2=fstride2,
                     T2=T2, F2=F2, TT2=TT2, FPR=FPR, Kpad=Kpad)

    kernel = functools.partial(_fused_subsample_kernel, F2=F2, TT2=TT2, FPR=FPR)

    M = F2 * TT2
    flops = 2 * B * ntiles * (M * Kpad * 9 * C + M * 9 * C * C + FPR * F2 * R * C * Cw)
    bytes_accessed = int(xp.size * 2 + B * (T2pad // FPR) * Cw * 4
                         + sum(int(np.prod(v.shape)) * v.dtype.itemsize
                               for v in packed.values()))

    out = pl.pallas_call(
        kernel,
        out_shape=jax.ShapeDtypeStruct((B, T2pad // FPR, Cw), jnp.float32),
        grid=grid,
        in_specs=[
            pl.BlockSpec((1, F2, TT2, Kpad), lambda b, j: (b, 0, j, 0)),   # fused input
            pl.BlockSpec((Kpad, 9 * C), lambda b, j: (0, 0)),              # conv1 block-diag
            pl.BlockSpec((9 * C, C), lambda b, j: (0, 0)),                 # conv2 (9C deep)
            pl.BlockSpec((F2, FPR, C, Cw), lambda b, j: (0, 0, 0, 0)),     # linear (packed)
            pl.BlockSpec((1, 9 * C), lambda b, j: (0, 0)),                 # b1 (tiled x9)
            pl.BlockSpec((1, C), lambda b, j: (0, 0)),                     # b2
            pl.BlockSpec((1, Cw), lambda b, j: (0, 0)),                    # b3 (packed)
        ],
        out_specs=pl.BlockSpec((1, R, Cw), lambda b, j: (b, j, 0)),
        compiler_params=pltpu.CompilerParams(
            dimension_semantics=("parallel", "parallel"),
            vmem_limit_bytes=vmem_limit),
        cost_estimate=pl.CostEstimate(flops=flops, transcendentals=0,
                                      bytes_accessed=bytes_accessed),
    )(xp, packed["wu_bd"], packed["w2cat"], packed["w3w"],
      packed["b1t"], packed["b2"], packed["b3w"])

    # unpack: packed row g = tile*R + r, lane block j  ->  frame t = tile*TT2 + r*FPR + j
    y = out.reshape(B, T2pad, Cop)[:, :T2, :C]
    tdf = tstride1 * tstride2
    new_len = jnp.minimum(
        jnp.ceil(x_len.astype(jnp.float32) / tdf).astype(jnp.int32), jnp.int32(T2))
    return y, new_len


# ------------------------- pure-JAX reference (check) ---------------------------

def _reference_forward(params, x, x_len, *, time_stride, feature_stride):
    tstride1, tstride2 = closest_factors(time_stride)
    fstride1, fstride2 = closest_factors(feature_stride)
    xi = x[:, None, :, :].astype(jnp.float32)                            # NCHW, Cin=1
    w1 = jnp.transpose(params["w1"][:, :, None, :], (3, 2, 0, 1))        # OIHW
    w2 = jnp.transpose(params["w2"], (3, 2, 0, 1))                       # OIHW
    dn = ("NCHW", "OIHW", "NCHW")
    h = jax.lax.conv_general_dilated(xi, w1, (tstride1, fstride1), "VALID",
                                     dimension_numbers=dn)
    h = jax.nn.relu(h + params["b1"][None, :, None, None])
    h = jax.lax.conv_general_dilated(h, w2, (tstride2, fstride2), "VALID",
                                     dimension_numbers=dn)
    h = jax.nn.relu(h + params["b2"][None, :, None, None])
    b, c, t, f = h.shape
    h = jnp.transpose(h, (0, 2, 1, 3)).reshape(b, t, c * f)
    y = h @ params["w3"] + params["b3"]
    tdf = tstride1 * tstride2
    nl = jnp.minimum(jnp.ceil(x_len.astype(jnp.float32) / tdf).astype(jnp.int32),
                     jnp.int32(t))
    return y, nl


# ----------------------------------- main ---------------------------------------

if __name__ == "__main__":
    B, T = 2, 16
    input_dim = 15          # feature dim D
    output_dim = 32
    time_stride = 2         # -> (2, 1); time_downsampling_factor = 2
    feature_stride = 4      # -> (2, 2)

    key = jax.random.PRNGKey(0)
    kp, kx = jax.random.split(key)
    params = init_params(kp, input_dim, output_dim, feature_stride)

    tstride1, tstride2 = closest_factors(time_stride)
    fstride1, fstride2 = closest_factors(feature_stride)
    F1 = (input_dim - 3) // fstride1 + 1
    F2 = (F1 - 3) // fstride2 + 1
    packed = pack_params(params, fstride1=fstride1, F2=F2)

    x = jax.random.normal(kx, (B, T, input_dim), jnp.float32)
    x_len = jnp.array([16, 11], dtype=jnp.int32)

    fwd = jax.jit(functools.partial(
        speech_embedding_forward, time_stride=time_stride,
        feature_stride=feature_stride, input_dim=input_dim,
        output_dim=output_dim))
    y, y_len = fwd(packed, x, x_len)
    y = jax.block_until_ready(y)
    y_len = jax.block_until_ready(y_len)

    # sanity check vs pure-JAX f32 reference (kernel uses bf16 MXU operands)
    y_ref, y_len_ref = _reference_forward(
        params, x, x_len, time_stride=time_stride, feature_stride=feature_stride)
    assert y.shape == y_ref.shape, (y.shape, y_ref.shape)
    assert bool(jnp.all(y_len == y_len_ref))
    max_err = float(jnp.max(jnp.abs(y - y_ref)))
    assert bool(jnp.allclose(y, y_ref, atol=3e-2, rtol=3e-2)), max_err

    print("KERNEL_OK")
</pallas_src>

<mosaic_0001>
module attributes {stable_mosaic.version = 11 : i64} {
  func.func @_fused_subsample_kernel(%arg0: i32, %arg1: i32, %arg2: memref<1x3x32x64xbf16, #tpu.memory_space<vmem>>, %arg3: memref<64x288xbf16, #tpu.memory_space<vmem>>, %arg4: memref<288x32xbf16, #tpu.memory_space<vmem>>, %arg5: memref<3x4x32x128xbf16, #tpu.memory_space<vmem>>, %arg6: memref<1x288xf32, #tpu.memory_space<vmem>>, %arg7: memref<1x32xf32, #tpu.memory_space<vmem>>, %arg8: memref<1x128xf32, #tpu.memory_space<vmem>>, %arg9: memref<1x8x128xf32, #tpu.memory_space<vmem>>) attributes {dimension_semantics = [#tpu.dimension_semantics<parallel>, #tpu.dimension_semantics<parallel>], iteration_bounds = array<i64: 2, 1>, scalar_prefetch = 0 : i64, scratch_operands = 0 : i64, tpu.core_type = #tpu.core_type<tc>, window_params = [{transform_indices = @transform_0, window_bounds = array<i64: 1, 3, 32, 64>}, {pipeline_mode = #tpu.pipeline_mode<synchronous>, transform_indices = @transform_1, window_bounds = array<i64: 64, 288>}, {pipeline_mode = #tpu.pipeline_mode<synchronous>, transform_indices = @transform_2, window_bounds = array<i64: 288, 32>}, {pipeline_mode = #tpu.pipeline_mode<synchronous>, transform_indices = @transform_3, window_bounds = array<i64: 3, 4, 32, 128>}, {pipeline_mode = #tpu.pipeline_mode<synchronous>, transform_indices = @transform_4, window_bounds = array<i64: 1, 288>}, {pipeline_mode = #tpu.pipeline_mode<synchronous>, transform_indices = @transform_5, window_bounds = array<i64: 1, 32>}, {pipeline_mode = #tpu.pipeline_mode<synchronous>, transform_indices = @transform_6, window_bounds = array<i64: 1, 128>}, {transform_indices = @transform_7, window_bounds = array<i64: 1, 8, 128>}]} {
    %c0 = arith.constant 0 : index
    %c0_0 = arith.constant 0 : index
    %c0_1 = arith.constant 0 : index
    %c0_2 = arith.constant 0 : index
    %0 = vector.load %arg2[%c0, %c0_0, %c0_1, %c0_2] : memref<1x3x32x64xbf16, #tpu.memory_space<vmem>>, vector<1x3x32x64xbf16>
    %1 = vector.shape_cast %0 : vector<1x3x32x64xbf16> to vector<96x64xbf16>
    %c0_3 = arith.constant 0 : index
    %c0_4 = arith.constant 0 : index
    %2 = vector.load %arg3[%c0_3, %c0_4] : memref<64x288xbf16, #tpu.memory_space<vmem>>, vector<64x288xbf16>
    %cst = arith.constant dense<0.000000e+00> : vector<96x288xf32>
    %3 = tpu.matmul %1, %2, %cst {dimension_numbers = #tpu.dot_dimension_numbers<[1], [0], [0], [1], [0, 0, 1, 1], [], []>} : vector<96x64xbf16>, vector<64x288xbf16>, vector<96x288xf32> -> vector<96x288xf32>
    %c0_5 = arith.constant 0 : index
    %c0_6 = arith.constant 0 : index
    %4 = vector.load %arg6[%c0_5, %c0_6] : memref<1x288xf32, #tpu.memory_space<vmem>>, vector<1x288xf32>
    %5 = vector.broadcast %4 : vector<1x288xf32> to vector<96x288xf32>
    %6 = arith.addf %3, %5 : vector<96x288xf32>
    %cst_7 = arith.constant 0.000000e+00 : f32
    %7 = vector.broadcast %cst_7 : f32 to vector<96x288xf32>
    %8 = arith.maximumf %6, %7 : vector<96x288xf32>
    %9 = arith.truncf %8 : vector<96x288xf32> to vector<96x288xbf16>
    %c0_8 = arith.constant 0 : index
    %c0_9 = arith.constant 0 : index
    %10 = vector.load %arg4[%c0_8, %c0_9] : memref<288x32xbf16, #tpu.memory_space<vmem>>, vector<288x32xbf16>
    %cst_10 = arith.constant dense<0.000000e+00> : vector<96x32xf32>
    %11 = tpu.matmul %9, %10, %cst_10 {dimension_numbers = #tpu.dot_dimension_numbers<[1], [0], [0], [1], [0, 0, 1, 1], [], []>} : vector<96x288xbf16>, vector<288x32xbf16>, vector<96x32xf32> -> vector<96x32xf32>
    %c0_11 = arith.constant 0 : index
    %c0_12 = arith.constant 0 : index
    %12 = vector.load %arg7[%c0_11, %c0_12] : memref<1x32xf32, #tpu.memory_space<vmem>>, vector<1x32xf32>
    %13 = vector.broadcast %12 : vector<1x32xf32> to vector<96x32xf32>
    %14 = arith.addf %11, %13 : vector<96x32xf32>
    %cst_13 = arith.constant 0.000000e+00 : f32
    %15 = vector.broadcast %cst_13 : f32 to vector<96x32xf32>
    %16 = arith.maximumf %14, %15 : vector<96x32xf32>
    %cst_14 = arith.constant 0.000000e+00 : f32
    %17 = vector.broadcast %cst_14 : f32 to vector<8x128xf32>
    %18 = vector.extract_strided_slice %16 {offsets = [0, 0], sizes = [8, 32], strides = [1, 1]} : vector<96x32xf32> to vector<8x32xf32>
    %19 = arith.truncf %18 : vector<8x32xf32> to vector<8x32xbf16>
    %c0_15 = arith.constant 0 : index
    %c0_16 = arith.constant 0 : index
    %c0_17 = arith.constant 0 : index
    %c0_18 = arith.constant 0 : index
    %20 = vector.load %arg5[%c0_15, %c0_16, %c0_17, %c0_18] : memref<3x4x32x128xbf16, #tpu.memory_space<vmem>>, vector<1x1x32x128xbf16>
    %21 = vector.shape_cast %20 : vector<1x1x32x128xbf16> to vector<32x128xbf16>
    %cst_19 = arith.constant dense<0.000000e+00> : vector<8x128xf32>
    %22 = tpu.matmul %19, %21, %cst_19 {dimension_numbers = #tpu.dot_dimension_numbers<[1], [0], [0], [1], [0, 0, 1, 1], [], []>} : vector<8x32xbf16>, vector<32x128xbf16>, vector<8x128xf32> -> vector<8x128xf32>
    %23 = arith.addf %17, %22 : vector<8x128xf32>
    %24 = vector.extract_strided_slice %16 {offsets = [32, 0], sizes = [8, 32], strides = [1, 1]} : vector<96x32xf32> to vector<8x32xf32>
    %25 = arith.truncf %24 : vector<8x32xf32> to vector<8x32xbf16>
    %c1 = arith.constant 1 : index
    %c0_20 = arith.constant 0 : index
    %c0_21 = arith.constant 0 : index
    %c0_22 = arith.constant 0 : index
    %26 = vector.load %arg5[%c1, %c0_20, %c0_21, %c0_22] : memref<3x4x32x128xbf16, #tpu.memory_space<vmem>>, vector<1x1x32x128xbf16>
    %27 = vector.shape_cast %26 : vector<1x1x32x128xbf16> to vector<32x128xbf16>
    %cst_23 = arith.constant dense<0.000000e+00> : vector<8x128xf32>
    %28 = tpu.matmul %25, %27, %cst_23 {dimension_numbers = #tpu.dot_dimension_numbers<[1], [0], [0], [1], [0, 0, 1, 1], [], []>} : vector<8x32xbf16>, vector<32x128xbf16>, vector<8x128xf32> -> vector<8x128xf32>
    %29 = arith.addf %23, %28 : vector<8x128xf32>
    %30 = vector.extract_strided_slice %16 {offsets = [64, 0], sizes = [8, 32], strides = [1, 1]} : vector<96x32xf32> to vector<8x32xf32>
    %31 = arith.truncf %30 : vector<8x32xf32> to vector<8x32xbf16>
    %c2 = arith.constant 2 : index
    %c0_24 = arith.constant 0 : index
    %c0_25 = arith.constant 0 : index
    %c0_26 = arith.constant 0 : index
    %32 = vector.load %arg5[%c2, %c0_24, %c0_25, %c0_26] : memref<3x4x32x128xbf16, #tpu.memory_space<vmem>>, vector<1x1x32x128xbf16>
    %33 = vector.shape_cast %32 : vector<1x1x32x128xbf16> to vector<32x128xbf16>
    %cst_27 = arith.constant dense<0.000000e+00> : vector<8x128xf32>
    %34 = tpu.matmul %31, %33, %cst_27 {dimension_numbers = #tpu.dot_dimension_numbers<[1], [0], [0], [1], [0, 0, 1, 1], [], []>} : vector<8x32xbf16>, vector<32x128xbf16>, vector<8x128xf32> -> vector<8x128xf32>
    %35 = arith.addf %29, %34 : vector<8x128xf32>
    %36 = vector.extract_strided_slice %16 {offsets = [8, 0], sizes = [8, 32], strides = [1, 1]} : vector<96x32xf32> to vector<8x32xf32>
    %37 = arith.truncf %36 : vector<8x32xf32> to vector<8x32xbf16>
    %c0_28 = arith.constant 0 : index
    %c1_29 = arith.constant 1 : index
    %c0_30 = arith.constant 0 : index
    %c0_31 = arith.constant 0 : index
    %38 = vector.load %arg5[%c0_28, %c1_29, %c0_30, %c0_31] : memref<3x4x32x128xbf16, #tpu.memory_space<vmem>>, vector<1x1x32x128xbf16>
    %39 = vector.shape_cast %38 : vector<1x1x32x128xbf16> to vector<32x128xbf16>
    %cst_32 = arith.constant dense<0.000000e+00> : vector<8x128xf32>
    %40 = tpu.matmul %37, %39, %cst_32 {dimension_numbers = #tpu.dot_dimension_numbers<[1], [0], [0], [1], [0, 0, 1, 1], [], []>} : vector<8x32xbf16>, vector<32x128xbf16>, vector<8x128xf32> -> vector<8x128xf32>
    %41 = arith.addf %35, %40 : vector<8x128xf32>
    %42 = vector.extract_strided_slice %16 {offsets = [40, 0], sizes = [8, 32], strides = [1, 1]} : vector<96x32xf32> to vector<8x32xf32>
    %43 = arith.truncf %42 : vector<8x32xf32> to vector<8x32xbf16>
    %c1_33 = arith.constant 1 : index
    %c1_34 = arith.constant 1 : index
    %c0_35 = arith.constant 0 : index
    %c0_36 = arith.constant 0 : index
    %44 = vector.load %arg5[%c1_33, %c1_34, %c0_35, %c0_36] : memref<3x4x32x128xbf16, #tpu.memory_space<vmem>>, vector<1x1x32x128xbf16>
    %45 = vector.shape_cast %44 : vector<1x1x32x128xbf16> to vector<32x128xbf16>
    %cst_37 = arith.constant dense<0.000000e+00> : vector<8x128xf32>
    %46 = tpu.matmul %43, %45, %cst_37 {dimension_numbers = #tpu.dot_dimension_numbers<[1], [0], [0], [1], [0, 0, 1, 1], [], []>} : vector<8x32xbf16>, vector<32x128xbf16>, vector<8x128xf32> -> vector<8x128xf32>
    %47 = arith.addf %41, %46 : vector<8x128xf32>
    %48 = vector.extract_strided_slice %16 {offsets = [72, 0], sizes = [8, 32], strides = [1, 1]} : vector<96x32xf32> to vector<8x32xf32>
    %49 = arith.truncf %48 : vector<8x32xf32> to vector<8x32xbf16>
    %c2_38 = arith.constant 2 : index
    %c1_39 = arith.constant 1 : index
    %c0_40 = arith.constant 0 : index
    %c0_41 = arith.constant 0 : index
    %50 = vector.load %arg5[%c2_38, %c1_39, %c0_40, %c0_41] : memref<3x4x32x128xbf16, #tpu.memory_space<vmem>>, vector<1x1x32x128xbf16>
    %51 = vector.shape_cast %50 : vector<1x1x32x128xbf16> to vector<32x128xbf16>
    %cst_42 = arith.constant dense<0.000000e+00> : vector<8x128xf32>
    %52 = tpu.matmul %49, %51, %cst_42 {dimension_numbers = #tpu.dot_dimension_numbers<[1], [0], [0], [1], [0, 0, 1, 1], [], []>} : vector<8x32xbf16>, vector<32x128xbf16>, vector<8x128xf32> -> vector<8x128xf32>
    %53 = arith.addf %47, %52 : vector<8x128xf32>
    %54 = vector.extract_strided_slice %16 {offsets = [16, 0], sizes = [8, 32], strides = [1, 1]} : vector<96x32xf32> to vector<8x32xf32>
    %55 = arith.truncf %54 : vector<8x32xf32> to vector<8x32xbf16>
    %c0_43 = arith.constant 0 : index
    %c2_44 = arith.constant 2 : index
    %c0_45 = arith.constant 0 : index
    %c0_46 = arith.constant 0 : index
    %56 = vector.load %arg5[%c0_43, %c2_44, %c0_45, %c0_46] : memref<3x4x32x128xbf16, #tpu.memory_space<vmem>>, vector<1x1x32x128xbf16>
    %57 = vector.shape_cast %56 : vector<1x1x32x128xbf16> to vector<32x128xbf16>
    %cst_47 = arith.constant dense<0.000000e+00> : vector<8x128xf32>
    %58 = tpu.matmul %55, %57, %cst_47 {dimension_numbers = #tpu.dot_dimension_numbers<[1], [0], [0], [1], [0, 0, 1, 1], [], []>} : vector<8x32xbf16>, vector<32x128xbf16>, vector<8x128xf32> -> vector<8x128xf32>
    %59 = arith.addf %53, %58 : vector<8x128xf32>
    %60 = vector.extract_strided_slice %16 {offsets = [48, 0], sizes = [8, 32], strides = [1, 1]} : vector<96x32xf32> to vector<8x32xf32>
    %61 = arith.truncf %60 : vector<8x32xf32> to vector<8x32xbf16>
    %c1_48 = arith.constant 1 : index
    %c2_49 = arith.constant 2 : index
    %c0_50 = arith.constant 0 : index
    %c0_51 = arith.constant 0 : index
    %62 = vector.load %arg5[%c1_48, %c2_49, %c0_50, %c0_51] : memref<3x4x32x128xbf16, #tpu.memory_space<vmem>>, vector<1x1x32x128xbf16>
    %63 = vector.shape_cast %62 : vector<1x1x32x128xbf16> to vector<32x128xbf16>
    %cst_52 = arith.constant dense<0.000000e+00> : vector<8x128xf32>
    %64 = tpu.matmul %61, %63, %cst_52 {dimension_numbers = #tpu.dot_dimension_numbers<[1], [0], [0], [1], [0, 0, 1, 1], [], []>} : vector<8x32xbf16>, vector<32x128xbf16>, vector<8x128xf32> -> vector<8x128xf32>
    %65 = arith.addf %59, %64 : vector<8x128xf32>
    %66 = vector.extract_strided_slice %16 {offsets = [80, 0], sizes = [8, 32], strides = [1, 1]} : vector<96x32xf32> to vector<8x32xf32>
    %67 = arith.truncf %66 : vector<8x32xf32> to vector<8x32xbf16>
    %c2_53 = arith.constant 2 : index
    %c2_54 = arith.constant 2 : index
    %c0_55 = arith.constant 0 : index
    %c0_56 = arith.constant 0 : index
    %68 = vector.load %arg5[%c2_53, %c2_54, %c0_55, %c0_56] : memref<3x4x32x128xbf16, #tpu.memory_space<vmem>>, vector<1x1x32x128xbf16>
    %69 = vector.shape_cast %68 : vector<1x1x32x128xbf16> to vector<32x128xbf16>
    %cst_57 = arith.constant dense<0.000000e+00> : vector<8x128xf32>
    %70 = tpu.matmul %67, %69, %cst_57 {dimension_numbers = #tpu.dot_dimension_numbers<[1], [0], [0], [1], [0, 0, 1, 1], [], []>} : vector<8x32xbf16>, vector<32x128xbf16>, vector<8x128xf32> -> vector<8x128xf32>
    %71 = arith.addf %65, %70 : vector<8x128xf32>
    %72 = vector.extract_strided_slice %16 {offsets = [24, 0], sizes = [8, 32], strides = [1, 1]} : vector<96x32xf32> to vector<8x32xf32>
    %73 = arith.truncf %72 : vector<8x32xf32> to vector<8x32xbf16>
    %c0_58 = arith.constant 0 : index
    %c3 = arith.constant 3 : index
    %c0_59 = arith.constant 0 : index
    %c0_60 = arith.constant 0 : index
    %74 = vector.load %arg5[%c0_58, %c3, %c0_59, %c0_60] : memref<3x4x32x128xbf16, #tpu.memory_space<vmem>>, vector<1x1x32x128xbf16>
    %75 = vector.shape_cast %74 : vector<1x1x32x128xbf16> to vector<32x128xbf16>
    %cst_61 = arith.constant dense<0.000000e+00> : vector<8x128xf32>
    %76 = tpu.matmul %73, %75, %cst_61 {dimension_numbers = #tpu.dot_dimension_numbers<[1], [0], [0], [1], [0, 0, 1, 1], [], []>} : vector<8x32xbf16>, vector<32x128xbf16>, vector<8x128xf32> -> vector<8x128xf32>
    %77 = arith.addf %71, %76 : vector<8x128xf32>
    %78 = vector.extract_strided_slice %16 {offsets = [56, 0], sizes = [8, 32], strides = [1, 1]} : vector<96x32xf32> to vector<8x32xf32>
    %79 = arith.truncf %78 : vector<8x32xf32> to vector<8x32xbf16>
    %c1_62 = arith.constant 1 : index
    %c3_63 = arith.constant 3 : index
    %c0_64 = arith.constant 0 : index
    %c0_65 = arith.constant 0 : index
    %80 = vector.load %arg5[%c1_62, %c3_63, %c0_64, %c0_65] : memref<3x4x32x128xbf16, #tpu.memory_space<vmem>>, vector<1x1x32x128xbf16>
    %81 = vector.shape_cast %80 : vector<1x1x32x128xbf16> to vector<32x128xbf16>
    %cst_66 = arith.constant dense<0.000000e+00> : vector<8x128xf32>
    %82 = tpu.matmul %79, %81, %cst_66 {dimension_numbers = #tpu.dot_dimension_numbers<[1], [0], [0], [1], [0, 0, 1, 1], [], []>} : vector<8x32xbf16>, vector<32x128xbf16>, vector<8x128xf32> -> vector<8x128xf32>
    %83 = arith.addf %77, %82 : vector<8x128xf32>
    %84 = vector.extract_strided_slice %16 {offsets = [88, 0], sizes = [8, 32], strides = [1, 1]} : vector<96x32xf32> to vector<8x32xf32>
    %85 = arith.truncf %84 : vector<8x32xf32> to vector<8x32xbf16>
    %c2_67 = arith.constant 2 : index
    %c3_68 = arith.constant 3 : index
    %c0_69 = arith.constant 0 : index
    %c0_70 = arith.constant 0 : index
    %86 = vector.load %arg5[%c2_67, %c3_68, %c0_69, %c0_70] : memref<3x4x32x128xbf16, #tpu.memory_space<vmem>>, vector<1x1x32x128xbf16>
    %87 = vector.shape_cast %86 : vector<1x1x32x128xbf16> to vector<32x128xbf16>
    %cst_71 = arith.constant dense<0.000000e+00> : vector<8x128xf32>
    %88 = tpu.matmul %85, %87, %cst_71 {dimension_numbers = #tpu.dot_dimension_numbers<[1], [0], [0], [1], [0, 0, 1, 1], [], []>} : vector<8x32xbf16>, vector<32x128xbf16>, vector<8x128xf32> -> vector<8x128xf32>
    %89 = arith.addf %83, %88 : vector<8x128xf32>
    %c0_72 = arith.constant 0 : index
    %c0_73 = arith.constant 0 : index
    %90 = vector.load %arg8[%c0_72, %c0_73] : memref<1x128xf32, #tpu.memory_space<vmem>>, vector<1x128xf32>
    %91 = vector.broadcast %90 : vector<1x128xf32> to vector<8x128xf32>
    %92 = arith.addf %89, %91 : vector<8x128xf32>
    %93 = vector.shape_cast %92 : vector<8x128xf32> to vector<1x8x128xf32>
    %c0_74 = arith.constant 0 : index
    %c0_75 = arith.constant 0 : index
    %c0_76 = arith.constant 0 : index
    %94 = vector.load %arg9[%c0_74, %c0_75, %c0_76] : memref<1x8x128xf32, #tpu.memory_space<vmem>>, vector<1x8x128xf32>
    tpu.vector_store %arg9[%c0_74, %c0_75, %c0_76], %93 {strides = array<i32>} : memref<1x8x128xf32, #tpu.memory_space<vmem>>, vector<1x8x128xf32>,
    return
  }
  func.func @transform_0(%arg0: i32, %arg1: i32) -> (i32, i32, i32, i32) {
    %c0_i32 = arith.constant 0 : i32
    %c0_i32_0 = arith.constant 0 : i32
    %c0_i32_1 = arith.constant 0 : i32
    return %arg0, %c0_i32, %arg1, %c0_i32_0 : i32, i32, i32, i32
  }
  func.func @transform_1(%arg0: i32, %arg1: i32) -> (i32, i32) {
    %c0_i32 = arith.constant 0 : i32
    %c0_i32_0 = arith.constant 0 : i32
    %c0_i32_1 = arith.constant 0 : i32
    return %c0_i32, %c0_i32_0 : i32, i32
  }
  func.func @transform_2(%arg0: i32, %arg1: i32) -> (i32, i32) {
    %c0_i32 = arith.constant 0 : i32
    %c0_i32_0 = arith.constant 0 : i32
    %c0_i32_1 = arith.constant 0 : i32
    return %c0_i32, %c0_i32_0 : i32, i32
  }
  func.func @transform_3(%arg0: i32, %arg1: i32) -> (i32, i32, i32, i32) {
    %c0_i32 = arith.constant 0 : i32
    %c0_i32_0 = arith.constant 0 : i32
    %c0_i32_1 = arith.constant 0 : i32
    %c0_i32_2 = arith.constant 0 : i32
    %c0_i32_3 = arith.constant 0 : i32
    return %c0_i32, %c0_i32_0, %c0_i32_1, %c0_i32_2 : i32, i32, i32, i32
  }
  func.func @transform_4(%arg0: i32, %arg1: i32) -> (i32, i32) {
    %c0_i32 = arith.constant 0 : i32
    %c0_i32_0 = arith.constant 0 : i32
    %c0_i32_1 = arith.constant 0 : i32
    return %c0_i32, %c0_i32_0 : i32, i32
  }
  func.func @transform_5(%arg0: i32, %arg1: i32) -> (i32, i32) {
    %c0_i32 = arith.constant 0 : i32
    %c0_i32_0 = arith.constant 0 : i32
    %c0_i32_1 = arith.constant 0 : i32
    return %c0_i32, %c0_i32_0 : i32, i32
  }
  func.func @transform_6(%arg0: i32, %arg1: i32) -> (i32, i32) {
    %c0_i32 = arith.constant 0 : i32
    %c0_i32_0 = arith.constant 0 : i32
    %c0_i32_1 = arith.constant 0 : i32
    return %c0_i32, %c0_i32_0 : i32, i32
  }
  func.func @transform_7(%arg0: i32, %arg1: i32) -> (i32, i32, i32) {
    %c0_i32 = arith.constant 0 : i32
    %c0_i32_0 = arith.constant 0 : i32
    return %arg0, %arg1, %c0_i32 : i32, i32, i32
  }
}

</mosaic_0001>

<llo_original>
// kernel: speech_embedding_forward.1
$region0: #{speech_embedding_forward.1}
  #allocation0 [shape = 'u32[]', space=smem, size = 0x4, offset = 0x4, fixed_abs, tag = 'smem constant byte address 0x4 - core index']
  #allocation1 [shape = 'u32[144,128]{1,0:T(1,128)}', space=vmem, size = 0x12000, scoped, tag = 'internal scratch']
  %s0 = inlined_call_operand.vmem [shape: bf16[2,3,32,64], index: 0, kind: input, shape index: {}]
  %s1 = inlined_call_operand.vmem [shape: bf16[64,288], index: 1, kind: input, shape index: {}]
  %s2 = inlined_call_operand.vmem [shape: bf16[288,32], index: 2, kind: input, shape index: {}]
  %s3 = inlined_call_operand.vmem [shape: bf16[3,4,32,128], index: 3, kind: input, shape index: {}]
  %s4 = inlined_call_operand.vmem [shape: f32[1,288], index: 4, kind: input, shape index: {}]
  %s5 = inlined_call_operand.vmem [shape: f32[1,32], index: 5, kind: input, shape index: {}]
  %s6 = inlined_call_operand.vmem [shape: f32[1,128], index: 6, kind: input, shape index: {}]
  %s7 = inlined_call_operand.vmem [shape: f32[2,8,128], index: 7, kind: output, shape index: {}]
  %s8 = sld [smem:[#allocation0]]
  $region61: #{speech_embedding_forward.1} parent=0
    _
  %s10 = ssub.s32 1, %s8
  %s11 = scalar_select 0, %s10, %s8
  loop: start=0, step=1, limit=4
  $region2: #{speech_embedding_forward.1} parent=0 // loop_pre_header
    _
  $region3: #{speech_embedding_forward.1} parent=0 // loop_header
    %s13 = sphi 0, %s17
    %p14 = scmp.ge.s32.totalorder %s13, 4
    %s20 = sphi 0, %s32
    %s21 = sphi 0, %s28
    %s22 = sphi 0, %s20
    %s23 = sphi 0, %s21
    %s24 = sphi 0, %s22
    %s25 = sphi 0, %s23
    %s37 = sphi 0, %s39
    %s40 = sphi 0, %s37
    %s41 = sphi 0, %s40
    %s57 = sphi 0, %s41
    %s61 = sphi 0, %s61
    %s63 = sphi 0, %s61
    %s64 = sphi 0, %s63
    %s78 = sphi 0, %s64
    %s82 = sphi 0, %s82
    %s84 = sphi 0, %s82
    %s85 = sphi 0, %s84
    %s99 = sphi 0, %s85
    %s103 = sphi 0, %s103
    %s105 = sphi 0, %s103
    %s106 = sphi 0, %s105
    %s120 = sphi 0, %s106
    %s124 = sphi 0, %s124
    %s126 = sphi 0, %s124
    %s127 = sphi 0, %s126
    %s141 = sphi 0, %s127
    %s145 = sphi 0, %s145
    %s147 = sphi 0, %s145
    %s148 = sphi 0, %s147
    %s162 = sphi 0, %s148
    %s166 = sphi 0, %s166
    %s168 = sphi 0, %s166
    %s169 = sphi 0, %s168
    %s183 = sphi 0, %s169
    %s191 = sphi 0, %s193
    %s194 = sphi 0, %s191
    %s195 = sphi 0, %s194
    %s211 = sphi 0, %s195
  $region4: #{speech_embedding_forward.1} parent=0 // loop_header_branch
    %16 = sbr.rel (%p14) target = $region8
  $region5: #{speech_embedding_forward.1} parent=0 // loop_body
    %s18 = ssub.s32 %s13, 1
    %s19 = ssub.s32 %s13, 2
    %s26 = sadd.s32 1, %s21
    %p27 = scmp.ge.s32.totalorder %s26, 1
    %s28 = scalar_select %p27, 0, %s26
    %s29 = sadd.s32 1, %s20
    %s30 = scalar_select %p27, %s29, %s20
    %p31 = scmp.ge.s32.totalorder %s30, 2
    %s32 = scalar_select %p31, 0, %s30
    %s33 = ssub.s32 %s20, %s32
    %s34 = ssub.s32 %s21, %s28
    %s35 = sor.u32 %s33, %s34
    %p36 = scmp.eq.s32.totalorder %s35, 0
    %s38 = sadd.s32 %s37, 1
    %s39 = scalar_select %p36, %s37, %s38
    %p42 = pneg %p36
    %p43 = scmp.eq.s32.totalorder %s13, 1
    %p44 = por %p42, %p43
    %p45 = scmp.ne.s32.totalorder %s37, %s40
    %p46 = scmp.eq.s32.totalorder %s13, 0
    %p47 = por %p45, %p46
    %p48 = scmp.ne.s32.totalorder %s37, %s40
    %p49 = scmp.eq.s32.totalorder %s18, 1
    %p50 = por %p48, %p49
    %p51 = scmp.ne.s32.totalorder %s40, %s41
    %p52 = scmp.eq.s32.totalorder %s18, 0
    %p53 = por %p51, %p52
    %p54 = scmp.ne.s32.totalorder %s40, %s41
    %p55 = scmp.eq.s32.totalorder %s19, 1
    %p56 = por %p54, %p55
    %p58 = scmp.ne.s32.totalorder %s41, %s57
    %p59 = scmp.eq.s32.totalorder %s19, 0
    %p60 = por %p58, %p59
    %s62 = sadd.s32 %s61, 1
    %p65 = scmp.eq.s32.totalorder %s13, 1
    %p66 = scmp.ne.s32.totalorder %s61, %s63
    %p67 = scmp.eq.s32.totalorder %s13, 0
    %p68 = por %p66, %p67
    %p69 = scmp.ne.s32.totalorder %s61, %s63
    %p70 = scmp.eq.s32.totalorder %s18, 1
    %p71 = por %p69, %p70
    %p72 = scmp.ne.s32.totalorder %s63, %s64
    %p73 = scmp.eq.s32.totalorder %s18, 0
    %p74 = por %p72, %p73
    %p75 = scmp.ne.s32.totalorder %s63, %s64
    %p76 = scmp.eq.s32.totalorder %s19, 1
    %p77 = por %p75, %p76
    %p79 = scmp.ne.s32.totalorder %s64, %s78
    %p80 = scmp.eq.s32.totalorder %s19, 0
    %p81 = por %p79, %p80
    %s83 = sadd.s32 %s82, 1
    %p86 = scmp.eq.s32.totalorder %s13, 1
    %p87 = scmp.ne.s32.totalorder %s82, %s84
    %p88 = scmp.eq.s32.totalorder %s13, 0
    %p89 = por %p87, %p88
    %p90 = scmp.ne.s32.totalorder %s82, %s84
    %p91 = scmp.eq.s32.totalorder %s18, 1
    %p92 = por %p90, %p91
    %p93 = scmp.ne.s32.totalorder %s84, %s85
    %p94 = scmp.eq.s32.totalorder %s18, 0
    %p95 = por %p93, %p94
    %p96 = scmp.ne.s32.totalorder %s84, %s85
    %p97 = scmp.eq.s32.totalorder %s19, 1
    %p98 = por %p96, %p97
    %p100 = scmp.ne.s32.totalorder %s85, %s99
    %p101 = scmp.eq.s32.totalorder %s19, 0
    %p102 = por %p100, %p101
    %s104 = sadd.s32 %s103, 1
    %p107 = scmp.eq.s32.totalorder %s13, 1
    %p108 = scmp.ne.s32.totalorder %s103, %s105
    %p109 = scmp.eq.s32.totalorder %s13, 0
    %p110 = por %p108, %p109
    %p111 = scmp.ne.s32.totalorder %s103, %s105
    %p112 = scmp.eq.s32.totalorder %s18, 1
    %p113 = por %p111, %p112
    %p114 = scmp.ne.s32.totalorder %s105, %s106
    %p115 = scmp.eq.s32.totalorder %s18, 0
    %p116 = por %p114, %p115
    %p117 = scmp.ne.s32.totalorder %s105, %s106
    %p118 = scmp.eq.s32.totalorder %s19, 1
    %p119 = por %p117, %p118
    %p121 = scmp.ne.s32.totalorder %s106, %s120
    %p122 = scmp.eq.s32.totalorder %s19, 0
    %p123 = por %p121, %p122
    %s125 = sadd.s32 %s124, 1
    %p128 = scmp.eq.s32.totalorder %s13, 1
    %p129 = scmp.ne.s32.totalorder %s124, %s126
    %p130 = scmp.eq.s32.totalorder %s13, 0
    %p131 = por %p129, %p130
    %p132 = scmp.ne.s32.totalorder %s124, %s126
    %p133 = scmp.eq.s32.totalorder %s18, 1
    %p134 = por %p132, %p133
    %p135 = scmp.ne.s32.totalorder %s126, %s127
    %p136 = scmp.eq.s32.totalorder %s18, 0
    %p137 = por %p135, %p136
    %p138 = scmp.ne.s32.totalorder %s126, %s127
    %p139 = scmp.eq.s32.totalorder %s19, 1
    %p140 = por %p138, %p139
    %p142 = scmp.ne.s32.totalorder %s127, %s141
    %p143 = scmp.eq.s32.totalorder %s19, 0
    %p144 = por %p142, %p143
    %s146 = sadd.s32 %s145, 1
    %p149 = scmp.eq.s32.totalorder %s13, 1
    %p150 = scmp.ne.s32.totalorder %s145, %s147
    %p151 = scmp.eq.s32.totalorder %s13, 0
    %p152 = por %p150, %p151
    %p153 = scmp.ne.s32.totalorder %s145, %s147
    %p154 = scmp.eq.s32.totalorder %s18, 1
    %p155 = por %p153, %p154
    %p156 = scmp.ne.s32.totalorder %s147, %s148
    %p157 = scmp.eq.s32.totalorder %s18, 0
    %p158 = por %p156, %p157
    %p159 = scmp.ne.s32.totalorder %s147, %s148
    %p160 = scmp.eq.s32.totalorder %s19, 1
    %p161 = por %p159, %p160
    %p163 = scmp.ne.s32.totalorder %s148, %s162
    %p164 = scmp.eq.s32.totalorder %s19, 0
    %p165 = por %p163, %p164
    %s167 = sadd.s32 %s166, 1
    %p170 = scmp.eq.s32.totalorder %s13, 1
    %p171 = scmp.ne.s32.totalorder %s166, %s168
    %p172 = scmp.eq.s32.totalorder %s13, 0
    %p173 = por %p171, %p172
    %p174 = scmp.ne.s32.totalorder %s166, %s168
    %p175 = scmp.eq.s32.totalorder %s18, 1
    %p176 = por %p174, %p175
    %p177 = scmp.ne.s32.totalorder %s168, %s169
    %p178 = scmp.eq.s32.totalorder %s18, 0
    %p179 = por %p177, %p178
    %p180 = scmp.ne.s32.totalorder %s168, %s169
    %p181 = scmp.eq.s32.totalorder %s19, 1
    %p182 = por %p180, %p181
    %p184 = scmp.ne.s32.totalorder %s169, %s183
    %p185 = scmp.eq.s32.totalorder %s19, 0
    %p186 = por %p184, %p185
    %s187 = ssub.s32 %s20, %s32
    %s188 = ssub.s32 %s21, %s28
    %s189 = sor.u32 %s187, %s188
    %p190 = scmp.eq.s32.totalorder %s189, 0
    %s192 = sadd.s32 %s191, 1
    %s193 = scalar_select %p190, %s191, %s192
    %p196 = pneg %p190
    %p197 = scmp.eq.s32.totalorder %s13, 1
    %p198 = por %p196, %p197
    %p199 = scmp.ne.s32.totalorder %s191, %s194
    %p200 = scmp.eq.s32.totalorder %s13, 0
    %p201 = por %p199, %p200
    %p202 = scmp.ne.s32.totalorder %s191, %s194
    %p203 = scmp.eq.s32.totalorder %s18, 1
    %p204 = por %p202, %p203
    %p205 = scmp.ne.s32.totalorder %s194, %s195
    %p206 = scmp.eq.s32.totalorder %s18, 0
    %p207 = por %p205, %p206
    %p208 = scmp.ne.s32.totalorder %s194, %s195
    %p209 = scmp.eq.s32.totalorder %s19, 1
    %p210 = por %p208, %p209
    %p212 = scmp.ne.s32.totalorder %s195, %s211
    %p213 = scmp.eq.s32.totalorder %s19, 0
    %p214 = por %p212, %p213
    %p215 = scmp.le.s32.totalorder 1, %s13
    %p216 = scmp.lt.s32.totalorder %s13, 3
    %p217 = pnand %p215, %p216
    %p218 = pneg %p217
    // Predicated region
    $region9: #{speech_embedding_forward.1} parent=5 // pred_check
      _
    $region10: #{speech_embedding_forward.1} parent=5 // pred_check_branch
      %220 = sbr.rel (%p217) target = $region12
    $region11: #{speech_embedding_forward.1} parent=5 // pred_region
      %s221 = ssub.s32 %s13, 1
      // Predicated region
      $region13: #{speech_embedding_forward.1} parent=11 // pred_check
        %p222 = pneg %p74
      $region14: #{speech_embedding_forward.1} parent=11 // pred_check_branch
        %224 = sbr.rel (%p222) target = $region16
      $region15: #{speech_embedding_forward.1} parent=11 // pred_region
        _
      $region16: #{speech_embedding_forward.1} parent=11 // pred_fallthru
        _
      // Predicated region
      $region17: #{speech_embedding_forward.1} parent=11 // pred_check
        %p225 = pneg %p95
      $region18: #{speech_embedding_forward.1} parent=11 // pred_check_branch
        %227 = sbr.rel (%p225) target = $region20
      $region19: #{speech_embedding_forward.1} parent=11 // pred_region
        _
      $region20: #{speech_embedding_forward.1} parent=11 // pred_fallthru
        _
      // Predicated region
      $region21: #{speech_embedding_forward.1} parent=11 // pred_check
        %p228 = pneg %p116
      $region22: #{speech_embedding_forward.1} parent=11 // pred_check_branch
        %230 = sbr.rel (%p228) target = $region24
      $region23: #{speech_embedding_forward.1} parent=11 // pred_region
        _
      $region24: #{speech_embedding_forward.1} parent=11 // pred_fallthru
        _
      // Predicated region
      $region25: #{speech_embedding_forward.1} parent=11 // pred_check
        %p231 = pneg %p137
      $region26: #{speech_embedding_forward.1} parent=11 // pred_check_branch
        %233 = sbr.rel (%p231) target = $region28
      $region27: #{speech_embedding_forward.1} parent=11 // pred_region
        _
      $region28: #{speech_embedding_forward.1} parent=11 // pred_fallthru
        _
      // Predicated region
      $region29: #{speech_embedding_forward.1} parent=11 // pred_check
        %p234 = pneg %p158
      $region30: #{speech_embedding_forward.1} parent=11 // pred_check_branch
        %236 = sbr.rel (%p234) target = $region32
      $region31: #{speech_embedding_forward.1} parent=11 // pred_region
        _
      $region32: #{speech_embedding_forward.1} parent=11 // pred_fallthru
        _
      // Predicated region
      $region33: #{speech_embedding_forward.1} parent=11 // pred_check
        %p237 = pneg %p179
      $region34: #{speech_embedding_forward.1} parent=11 // pred_check_branch
        %239 = sbr.rel (%p237) target = $region36
      $region35: #{speech_embedding_forward.1} parent=11 // pred_region
        _
      $region36: #{speech_embedding_forward.1} parent=11 // pred_fallthru
        _
    $region12: #{speech_embedding_forward.1} parent=5 // pred_fallthru
      _
    %p240 = scmp.lt.s32.totalorder %s13, 2
    // Predicated region
    $region37: #{speech_embedding_forward.1} parent=5 // pred_check
      %p241 = pneg %p240
    $region38: #{speech_embedding_forward.1} parent=5 // pred_check_branch
      %243 = sbr.rel (%p241) target = $region40
    $region39: #{speech_embedding_forward.1} parent=5 // pred_region
      // Predicated region
      $region41: #{speech_embedding_forward.1} parent=39 // pred_check
        %p244 = pneg %p47
      $region42: #{speech_embedding_forward.1} parent=39 // pred_check_branch
        %246 = sbr.rel (%p244) target = $region44
      $region43: #{speech_embedding_forward.1} parent=39 // pred_region
        %s247 = smul.u32 4, %s21
        %p248 = scmp.lt.s32.totalorder %s20, 1
        %s249 = scalar_select %p248, %s20, 1
        %p250 = scmp.lt.s32.totalorder %s247, 3
        %s251 = scalar_select %p250, %s247, 3
        %s252 = smul.addr %s249, 12
        %s253 = sadd.s32 %s251, %s252
        %s254 = smul.addr %s253, 4
        %s255 = scalar_lea.vmem %s0, %s254
        %s256 = smul.u32 4, %s21
      $region44: #{speech_embedding_forward.1} parent=39 // pred_fallthru
        _
    $region40: #{speech_embedding_forward.1} parent=5 // pred_fallthru
      _
    %p257 = scmp.le.s32.totalorder 1, %s13
    %p258 = scmp.lt.s32.totalorder %s13, 3
    %p259 = pnand %p257, %p258
    %p260 = pneg %p259
    // Predicated region
    $region45: #{speech_embedding_forward.1} parent=5 // pred_check
      _
    $region46: #{speech_embedding_forward.1} parent=5 // pred_check_branch
      %262 = sbr.rel (%p259) target = $region48
    $region47: #{speech_embedding_forward.1} parent=5 // pred_region
      %s263 = ssub.s32 %s13, 1
      %s264 = smul.u32 4, %s23
      %p265 = scmp.lt.s32.totalorder %s22, 1
      %s266 = scalar_select %p265, %s22, 1
      %p267 = scmp.lt.s32.totalorder %s264, 3
      %s268 = scalar_select %p267, %s264, 3
      %s269 = smul.addr %s266, 12
      %s270 = sadd.s32 %s268, %s269
      %s271 = smul.addr %s270, 4
      %s272 = scalar_lea.vmem %s0, %s271
      %p273 = pneg %p53
      %p274 = pneg %p50
      %p275 = pneg %p74
      %p276 = pneg %p71
      %p277 = pneg %p95
      %p278 = pneg %p92
      %p279 = pneg %p116
      %p280 = pneg %p113
      %p281 = pneg %p137
      %p282 = pneg %p134
      %p283 = pneg %p158
      %p284 = pneg %p155
      %p285 = pneg %p179
      %p286 = pneg %p176
      %p287 = pneg %p207
      %p288 = pneg %p204
      %p289 = scmp.lt.s32.totalorder %s22, 1
      %s290 = scalar_select %p289, %s22, 1
      %p291 = scmp.lt.s32.totalorder %s23, 0
      %s292 = scalar_select %p291, %s23, 0
      %s293 = sadd.s32 %s292, %s290
      %s294 = smul.addr %s293, 8
      %s295 = scalar_lea.vmem %s7, %s294
      %s296 = smul.u32 4, %s23
      %p297 = scmp.lt.s32.totalorder %s22, 1
      %s298 = scalar_select %p297, %s22, 1
      %p299 = scmp.lt.s32.totalorder %s296, 3
      %s300 = scalar_select %p299, %s296, 3
      %s301 = smul.addr %s298, 12
      %s302 = sadd.s32 %s300, %s301
      %s303 = smul.addr %s302, 4
      %s304 = scalar_lea.vmem %s0, %s303
      %s305 = smul.u32 4, %s23
      %p306 = scmp.lt.s32.totalorder %s22, 1
      %s307 = scalar_select %p306, %s22, 1
      %p308 = scmp.lt.s32.totalorder %s23, 0
      %s309 = scalar_select %p308, %s23, 0
      %s310 = sadd.s32 %s309, %s307
      %s311 = smul.addr %s310, 8
      %s312 = scalar_lea.vmem %s7, %s311
      %v314 = vld [vmem:[%s304] sm:$0xf]
      %v315 = vld [vmem:[%s304 + $0x4] sm:$0xf]
      %v316 = vld [vmem:[%s304 + $0x8] sm:$0xf]
      %v317 = vld [vmem:[%s304 + $0xc] sm:$0xf]
      %v318 = vld [vmem:[%s304 + $0x10] sm:$0xf]
      %v319 = vld [vmem:[%s304 + $0x14] sm:$0xf]
      %v320 = vld [vmem:[%s304 + $0x18] sm:$0xf]
      %v321 = vld [vmem:[%s304 + $0x1c] sm:$0xf]
      %v322 = vld [vmem:[%s304 + $0x20] sm:$0xf]
      %v323 = vld [vmem:[%s304 + $0x24] sm:$0xf]
      %v324 = vld [vmem:[%s304 + $0x28] sm:$0xf]
      %v325 = vld [vmem:[%s304 + $0x2c] sm:$0xf]
      %v326 = vld [vmem:[%s1] sm:$0xff]
      %v327 = vld [vmem:[%s1 + $0x8] sm:$0xf]
      %v328 = vld [vmem:[%s1 + $0xc] sm:$0xff]
      %v329 = vld [vmem:[%s1 + $0x14] sm:$0xf]
      %v330 = vld [vmem:[%s1 + $0x18] sm:$0xff]
      %v331 = vld [vmem:[%s1 + $0x20] sm:$0xf]
      %v332 = vld [vmem:[%s1 + $0x24] sm:$0xff]
      %v333 = vld [vmem:[%s1 + $0x2c] sm:$0xf]
      %v334 = vld [vmem:[%s1 + $0x30] sm:$0xff]
      %v335 = vld [vmem:[%s1 + $0x38] sm:$0xf]
      %v336 = vld [vmem:[%s1 + $0x3c] sm:$0xff]
      %v337 = vld [vmem:[%s1 + $0x44] sm:$0xf]
      %v338 = vld [vmem:[%s1 + $0x48] sm:$0xff]
      %v339 = vld [vmem:[%s1 + $0x50] sm:$0xf]
      %v340 = vld [vmem:[%s1 + $0x54] sm:$0xff]
      %v341 = vld [vmem:[%s1 + $0x5c] sm:$0xf]
      %v342 = vld [vmem:[%s4] sm:$0x7]
      %v344 = vlaneseq
      %v345 = vshrl.u32 %v344, 7
      %v346 = vsub.s32 0, %v345
      %v347 = vrot.slane %v342, %v346
      %v348 = vlaneseq
      %v349 = vshrl.u32 %v348, 7
      %v350 = vsub.s32 1, %v349
      %v351 = vrot.slane %v342, %v350
      %v352 = vlaneseq
      %v353 = vshrl.u32 %v352, 7
      %v354 = vsub.s32 2, %v353
      %v355 = vrot.slane %v342, %v354
      %v371 = vunpack.c.l.b16 %v314
      %v372 = vunpack.c.l.b16 %v315
      %v373 = vunpack.c.l.b16 %v316
      %v374 = vunpack.c.l.b16 %v317
      %v375 = vunpack.c.l.b16 %v318
      %v376 = vunpack.c.l.b16 %v319
      %v377 = vunpack.c.l.b16 %v320
      %v378 = vunpack.c.l.b16 %v321
      %v379 = vunpack.c.l.b16 %v322
      %v380 = vunpack.c.l.b16 %v323
      %v381 = vunpack.c.l.b16 %v324
      %v382 = vunpack.c.l.b16 %v325
      %v383 = vpack.c.b16 %v372, %v371
      %v384 = vpack.c.b16 %v374, %v373
      %v385 = vpack.c.b16 %v376, %v375
      %v386 = vpack.c.b16 %v378, %v377
      %v387 = vpack.c.b16 %v380, %v379
      %v388 = vpack.c.b16 %v382, %v381
      %v405 = vunpack.c.l.b16 %v326
      %v406 = vunpack.c.h.b16 %v326
      %v407 = vunpack.c.l.b16 %v327
      %v408 = vunpack.c.l.b16 %v328
      %v409 = vunpack.c.h.b16 %v328
      %v410 = vunpack.c.l.b16 %v329
      %v411 = vunpack.c.l.b16 %v330
      %v412 = vunpack.c.h.b16 %v330
      %v413 = vunpack.c.l.b16 %v331
      %v414 = vunpack.c.l.b16 %v332
      %v415 = vunpack.c.h.b16 %v332
      %v416 = vunpack.c.l.b16 %v333
      %v417 = vunpack.c.l.b16 %v334
      %v418 = vunpack.c.h.b16 %v334
      %v419 = vunpack.c.l.b16 %v335
      %v420 = vunpack.c.l.b16 %v336
      %v421 = vunpack.c.h.b16 %v336
      %v422 = vunpack.c.l.b16 %v337
      %v423 = vunpack.c.l.b16 %v338
      %v424 = vunpack.c.h.b16 %v338
      %v425 = vunpack.c.l.b16 %v339
      %v426 = vunpack.c.l.b16 %v340
      %v427 = vunpack.c.h.b16 %v340
      %v428 = vunpack.c.l.b16 %v341
      %v429 = vpack.c.b16 %v408, %v405
      %v430 = vpack.c.b16 %v409, %v406
      %v431 = vpack.c.b16 %v410, %v407
      %v432 = vpack.c.b16 %v414, %v411
      %v433 = vpack.c.b16 %v415, %v412
      %v434 = vpack.c.b16 %v416, %v413
      %v435 = vpack.c.b16 %v420, %v417
      %v436 = vpack.c.b16 %v421, %v418
      %v437 = vpack.c.b16 %v422, %v419
      %v438 = vpack.c.b16 %v426, %v423
      %v439 = vpack.c.b16 %v427, %v424
      %v440 = vpack.c.b16 %v428, %v425
      %vm453 = vcmask 523264
      %v455 = vsel %vm453, %v383, 0
      %v458 = vsel %vm453, %v384, 0
      %v461 = vsel %vm453, %v385, 0
      %v464 = vsel %vm453, %v386, 0
      %v467 = vsel %vm453, %v387, 0
      %v470 = vsel %vm453, %v388, 0
      %472 = vmatprep.subr.bf16.mxu0 %v430
      %473 = vmatpush1.bf16.msra.mxu0 %v429
      %474 = vmatprep.subr.bf16.mxu0 %v433
      %475 = vmatpush1.bf16.msra.mxu0 %v432
      %476 = vmatprep.subr.bf16.mxu0 %v436
      %477 = vmatpush1.bf16.msra.mxu0 %v435
      %478 = vmatprep.subr.bf16.mxu0 %v439
      %479 = vmatpush1.bf16.msra.mxu0 %v438
      %480 = vmatprep.subr.bf16.mxu0 0
      %481 = vmatpush1.bf16.msra.mxu0 0
      %482 = vmatprep.subr.bf16.mxu0 0
      %483 = vmatpush1.bf16.msra.mxu0 0
      %484 = vmatprep.subr.bf16.mxu0 0
      %485 = vmatpush1.bf16.msra.mxu0 0
      %486 = vmatprep.subr.bf16.mxu0 0
      %487 = vmatpush1.bf16.msra.mxu0 0
      %488 = vmatprep.subr.bf16.mxu0 0
      %489 = vmatpush1.bf16.msra.mxu0 0
      %490 = vmatprep.subr.bf16.mxu0 0
      %491 = vmatpush1.bf16.msra.mxu0 0
      %492 = vmatprep.subr.bf16.mxu0 0
      %493 = vmatpush1.bf16.msra.mxu0 0
      %494 = vmatprep.subr.bf16.mxu0 0
      %495 = vmatpush1.bf16.msra.mxu0 0
      %496 = vmatprep.subr.bf16.mxu0 0
      %497 = vmatpush1.bf16.msra.mxu0 0
      %498 = vmatprep.subr.bf16.mxu0 0
      %499 = vmatpush1.bf16.msra.mxu0 0
      %500 = vmatprep.subr.bf16.mxu0 0
      %501 = vmatpush1.bf16.msra.mxu0 0
      %502 = vmatprep.subr.bf16.mxu0 0
      %503 = vmatpush1.bf16.msra.mxu0 0
      %504 = vmatprep.mubr.bf16.mxu0 0
      %505 = vmatmul.mubr.bf16.gmra.mrb[0].mxu0 %v455
      %v506 = vpop.f32.mrb[0].mxu0
      %v507 = vadd.f32 %v347, %v506
      %v508 = vpop.f32.mrb[0].mxu0
      %v509 = vadd.f32 %v351, %v508
      %v510 = vpop.f32.mrb[0].mxu0
      %v511 = vadd.f32 %v347, %v510
      %v512 = vpop.f32.mrb[0].mxu0
      %v513 = vadd.f32 %v351, %v512
      %514 = vmatprep.mubr.bf16.mxu0 0
      %515 = vmatmul.mubr.bf16.gmra.mrb[0].mxu0 %v458
      %v516 = vpop.f32.mrb[0].mxu0
      %v517 = vadd.f32 %v347, %v516
      %v518 = vpop.f32.mrb[0].mxu0
      %v519 = vadd.f32 %v351, %v518
      %v520 = vpop.f32.mrb[0].mxu0
      %v521 = vadd.f32 %v347, %v520
      %v522 = vpop.f32.mrb[0].mxu0
      %v523 = vadd.f32 %v351, %v522
      %524 = vmatprep.mubr.bf16.mxu0 0
      %525 = vmatmul.mubr.bf16.gmra.mrb[0].mxu0 %v461
      %v526 = vpop.f32.mrb[0].mxu0
      %v527 = vadd.f32 %v347, %v526
      %v528 = vpop.f32.mrb[0].mxu0
      %v529 = vadd.f32 %v351, %v528
      %v530 = vpop.f32.mrb[0].mxu0
      %v531 = vadd.f32 %v347, %v530
      %v532 = vpop.f32.mrb[0].mxu0
      %v533 = vadd.f32 %v351, %v532
      %534 = vmatprep.mubr.bf16.mxu0 0
      %535 = vmatmul.mubr.bf16.gmra.mrb[0].mxu0 %v464
      %v536 = vpop.f32.mrb[0].mxu0
      %v537 = vadd.f32 %v347, %v536
      %v538 = vpop.f32.mrb[0].mxu0
      %v539 = vadd.f32 %v351, %v538
      %v540 = vpop.f32.mrb[0].mxu0
      %v541 = vadd.f32 %v347, %v540
      %v542 = vpop.f32.mrb[0].mxu0
      %v543 = vadd.f32 %v351, %v542
      %544 = vmatprep.mubr.bf16.mxu0 0
      %545 = vmatmul.mubr.bf16.gmra.mrb[0].mxu0 %v467
      %v546 = vpop.f32.mrb[0].mxu0
      %v547 = vadd.f32 %v347, %v546
      %v548 = vpop.f32.mrb[0].mxu0
      %v549 = vadd.f32 %v351, %v548
      %v550 = vpop.f32.mrb[0].mxu0
      %v551 = vadd.f32 %v347, %v550
      %v552 = vpop.f32.mrb[0].mxu0
      %v553 = vadd.f32 %v351, %v552
      %554 = vmatprep.mubr.bf16.mxu0 0
      %555 = vmatmul.mubr.bf16.gmra.mrb[0].mxu0 %v470
      %v556 = vpop.f32.mrb[0].mxu0
      %v557 = vadd.f32 %v347, %v556
      %v558 = vpop.f32.mrb[0].mxu0
      %v559 = vadd.f32 %v351, %v558
      %v560 = vpop.f32.mrb[0].mxu0
      %v561 = vadd.f32 %v347, %v560
      %v562 = vpop.f32.mrb[0].mxu0
      %v563 = vadd.f32 %v351, %v562
      %564 = vdwg.mxu0
      %565 = vmatprep.subr.bf16.mxu0 0
      %566 = vmatpush1.bf16.msra.mxu0 %v431
      %567 = vmatprep.subr.bf16.mxu0 0
      %568 = vmatpush1.bf16.msra.mxu0 %v434
      %569 = vmatprep.subr.bf16.mxu0 0
      %570 = vmatpush1.bf16.msra.mxu0 %v437
      %571 = vmatprep.subr.bf16.mxu0 0
      %572 = vmatpush1.bf16.msra.mxu0 %v440
      %573 = vmatprep.subr.bf16.mxu0 0
      %574 = vmatpush1.bf16.msra.mxu0 0
      %575 = vmatprep.subr.bf16.mxu0 0
      %576 = vmatpush1.bf16.msra.mxu0 0
      %577 = vmatprep.subr.bf16.mxu0 0
      %578 = vmatpush1.bf16.msra.mxu0 0
      %579 = vmatprep.subr.bf16.mxu0 0
      %580 = vmatpush1.bf16.msra.mxu0 0
      %581 = vmatprep.subr.bf16.mxu0 0
      %582 = vmatpush1.bf16.msra.mxu0 0
      %583 = vmatprep.subr.bf16.mxu0 0
      %584 = vmatpush1.bf16.msra.mxu0 0
      %585 = vmatprep.subr.bf16.mxu0 0
      %586 = vmatpush1.bf16.msra.mxu0 0
      %587 = vmatprep.subr.bf16.mxu0 0
      %588 = vmatpush1.bf16.msra.mxu0 0
      %589 = vmatprep.subr.bf16.mxu0 0
      %590 = vmatpush1.bf16.msra.mxu0 0
      %591 = vmatprep.subr.bf16.mxu0 0
      %592 = vmatpush1.bf16.msra.mxu0 0
      %593 = vmatprep.subr.bf16.mxu0 0
      %594 = vmatpush1.bf16.msra.mxu0 0
      %595 = vmatprep.subr.bf16.mxu0 0
      %596 = vmatpush1.bf16.msra.mxu0 0
      %597 = vmatprep.mubr.bf16.mxu0 0
      %598 = vmatmul.mubr.bf16.gmra.mrb[0].mxu0 %v455
      %v599 = vpop.f32.mrb[0].mxu0
      %v600 = vadd.f32 %v355, %v599
      %v601 = vpop.f32.mrb[0].mxu0
      %v602 = vpop.f32.mrb[0].mxu0
      %v603 = vadd.f32 %v355, %v602
      %v604 = vpop.f32.mrb[0].mxu0
      %605 = vmatprep.mubr.bf16.mxu0 0
      %606 = vmatmul.mubr.bf16.gmra.mrb[0].mxu0 %v458
      %v607 = vpop.f32.mrb[0].mxu0
      %v608 = vadd.f32 %v355, %v607
      %v609 = vpop.f32.mrb[0].mxu0
      %v610 = vpop.f32.mrb[0].mxu0
      %v611 = vadd.f32 %v355, %v610
      %v612 = vpop.f32.mrb[0].mxu0
      %613 = vmatprep.mubr.bf16.mxu0 0
      %614 = vmatmul.mubr.bf16.gmra.mrb[0].mxu0 %v461
      %v615 = vpop.f32.mrb[0].mxu0
      %v616 = vadd.f32 %v355, %v615
      %v617 = vpop.f32.mrb[0].mxu0
      %v618 = vpop.f32.mrb[0].mxu0
      %v619 = vadd.f32 %v355, %v618
      %v620 = vpop.f32.mrb[0].mxu0
      %621 = vmatprep.mubr.bf16.mxu0 0
      %622 = vmatmul.mubr.bf16.gmra.mrb[0].mxu0 %v464
      %v623 = vpop.f32.mrb[0].mxu0
      %v624 = vadd.f32 %v355, %v623
      %v625 = vpop.f32.mrb[0].mxu0
      %v626 = vpop.f32.mrb[0].mxu0
      %v627 = vadd.f32 %v355, %v626
      %v628 = vpop.f32.mrb[0].mxu0
      %629 = vmatprep.mubr.bf16.mxu0 0
      %630 = vmatmul.mubr.bf16.gmra.mrb[0].mxu0 %v467
      %v631 = vpop.f32.mrb[0].mxu0
      %v632 = vadd.f32 %v355, %v631
      %v633 = vpop.f32.mrb[0].mxu0
      %v634 = vpop.f32.mrb[0].mxu0
      %v635 = vadd.f32 %v355, %v634
      %v636 = vpop.f32.mrb[0].mxu0
      %637 = vmatprep.mubr.bf16.mxu0 0
      %638 = vmatmul.mubr.bf16.gmra.mrb[0].mxu0 %v470
      %v639 = vpop.f32.mrb[0].mxu0
      %v640 = vadd.f32 %v355, %v639
      %v641 = vpop.f32.mrb[0].mxu0
      %v642 = vpop.f32.mrb[0].mxu0
      %v643 = vadd.f32 %v355, %v642
      %v644 = vpop.f32.mrb[0].mxu0
      %645 = vdwg.mxu0
      %v646 = vmax.f32 %v507, 0.0
      %v647 = vmax.f32 %v509, 0.0
      %v648 = vmax.f32 %v600, 0.0
      %v649 = vmax.f32 %v511, 0.0
      %v650 = vmax.f32 %v513, 0.0
      %v651 = vmax.f32 %v603, 0.0
      %v652 = vmax.f32 %v517, 0.0
      %v653 = vmax.f32 %v519, 0.0
      %v654 = vmax.f32 %v608, 0.0
      %v655 = vmax.f32 %v521, 0.0
      %v656 = vmax.f32 %v523, 0.0
      %v657 = vmax.f32 %v611, 0.0
      %v658 = vmax.f32 %v527, 0.0
      %v659 = vmax.f32 %v529, 0.0
      %v660 = vmax.f32 %v616, 0.0
      %v661 = vmax.f32 %v531, 0.0
      %v662 = vmax.f32 %v533, 0.0
      %v663 = vmax.f32 %v619, 0.0
      %v664 = vmax.f32 %v537, 0.0
      %v665 = vmax.f32 %v539, 0.0
      %v666 = vmax.f32 %v624, 0.0
      %v667 = vmax.f32 %v541, 0.0
      %v668 = vmax.f32 %v543, 0.0
      %v669 = vmax.f32 %v627, 0.0
      %v670 = vmax.f32 %v547, 0.0
      %v671 = vmax.f32 %v549, 0.0
      %v672 = vmax.f32 %v632, 0.0
      %v673 = vmax.f32 %v551, 0.0
      %v674 = vmax.f32 %v553, 0.0
      %v675 = vmax.f32 %v635, 0.0
      %v676 = vmax.f32 %v557, 0.0
      %v677 = vmax.f32 %v559, 0.0
      %v678 = vmax.f32 %v640, 0.0
      %v679 = vmax.f32 %v561, 0.0
      %v680 = vmax.f32 %v563, 0.0
      %v681 = vmax.f32 %v643, 0.0
      %v682 = vpack.c.bf16 %v649, %v646
      %v683 = vpack.c.bf16 %v650, %v647
      %v684 = vpack.c.bf16 %v651, %v648
      %v685 = vpack.c.bf16 %v655, %v652
      %v686 = vpack.c.bf16 %v656, %v653
      %v687 = vpack.c.bf16 %v657, %v654
      %v688 = vpack.c.bf16 %v661, %v658
      %v689 = vpack.c.bf16 %v662, %v659
      %v690 = vpack.c.bf16 %v663, %v660
      %v691 = vpack.c.bf16 %v667, %v664
      %v692 = vpack.c.bf16 %v668, %v665
      %v693 = vpack.c.bf16 %v669, %v666
      %v694 = vpack.c.bf16 %v673, %v670
      %v695 = vpack.c.bf16 %v674, %v671
      %v696 = vpack.c.bf16 %v675, %v672
      %v697 = vpack.c.bf16 %v679, %v676
      %v698 = vpack.c.bf16 %v680, %v677
      %v699 = vpack.c.bf16 %v681, %v678
      %v700 = vld [vmem:[%s2] sm:$0xf]
      %v701 = vld [vmem:[%s2 + $0x4] sm:$0xf]
      %v702 = vld [vmem:[%s2 + $0x8] sm:$0xf]
      %v703 = vld [vmem:[%s2 + $0xc] sm:$0xf]
      %v704 = vld [vmem:[%s2 + $0x10] sm:$0xf]
      %v705 = vld [vmem:[%s2 + $0x14] sm:$0xf]
      %v706 = vld [vmem:[%s2 + $0x18] sm:$0xf]
      %v707 = vld [vmem:[%s2 + $0x1c] sm:$0xf]
      %v708 = vld [vmem:[%s2 + $0x20] sm:$0xf]
      %v709 = vld [vmem:[%s2 + $0x24] sm:$0xf]
      %v710 = vld [vmem:[%s2 + $0x28] sm:$0xf]
      %v711 = vld [vmem:[%s2 + $0x2c] sm:$0xf]
      %v712 = vld [vmem:[%s2 + $0x30] sm:$0xf]
      %v713 = vld [vmem:[%s2 + $0x34] sm:$0xf]
      %v714 = vld [vmem:[%s2 + $0x38] sm:$0xf]
      %v715 = vld [vmem:[%s2 + $0x3c] sm:$0xf]
      %v716 = vld [vmem:[%s2 + $0x40] sm:$0xf]
      %v717 = vld [vmem:[%s2 + $0x44] sm:$0xf]
      %v718 = vld [vmem:[%s2 + $0x48] sm:$0xf]
      %v719 = vld [vmem:[%s2 + $0x4c] sm:$0xf]
      %v720 = vld [vmem:[%s2 + $0x50] sm:$0xf]
      %v721 = vld [vmem:[%s2 + $0x54] sm:$0xf]
      %v722 = vld [vmem:[%s2 + $0x58] sm:$0xf]
      %v723 = vld [vmem:[%s2 + $0x5c] sm:$0xf]
      %v724 = vld [vmem:[%s2 + $0x60] sm:$0xf]
      %v725 = vld [vmem:[%s2 + $0x64] sm:$0xf]
      %v726 = vld [vmem:[%s2 + $0x68] sm:$0xf]
      %v727 = vld [vmem:[%s2 + $0x6c] sm:$0xf]
      %v728 = vld [vmem:[%s2 + $0x70] sm:$0xf]
      %v729 = vld [vmem:[%s2 + $0x74] sm:$0xf]
      %v730 = vld [vmem:[%s2 + $0x78] sm:$0xf]
      %v731 = vld [vmem:[%s2 + $0x7c] sm:$0xf]
      %v732 = vld [vmem:[%s2 + $0x80] sm:$0xf]
      %v733 = vld [vmem:[%s2 + $0x84] sm:$0xf]
      %v734 = vld [vmem:[%s2 + $0x88] sm:$0xf]
      %v735 = vld [vmem:[%s2 + $0x8c] sm:$0xf]
      %v736 = vld [vmem:[%s5] sm:$0x1]
      %v738 = vlaneseq
      %v739 = vshrl.u32 %v738, 7
      %v740 = vsub.s32 0, %v739
      %v741 = vrot.slane %v736, %v740
      %v779 = vunpack.c.l.b16 %v700
      %v780 = vunpack.c.l.b16 %v701
      %v781 = vunpack.c.l.b16 %v702
      %v782 = vunpack.c.l.b16 %v703
      %v783 = vunpack.c.l.b16 %v704
      %v784 = vunpack.c.l.b16 %v705
      %v785 = vunpack.c.l.b16 %v706
      %v786 = vunpack.c.l.b16 %v707
      %v787 = vunpack.c.l.b16 %v708
      %v788 = vunpack.c.l.b16 %v709
      %v789 = vunpack.c.l.b16 %v710
      %v790 = vunpack.c.l.b16 %v711
      %v791 = vunpack.c.l.b16 %v712
      %v792 = vunpack.c.l.b16 %v713
      %v793 = vunpack.c.l.b16 %v714
      %v794 = vunpack.c.l.b16 %v715
      %v795 = vunpack.c.l.b16 %v716
      %v796 = vunpack.c.l.b16 %v717
      %v797 = vunpack.c.l.b16 %v718
      %v798 = vunpack.c.l.b16 %v719
      %v799 = vunpack.c.l.b16 %v720
      %v800 = vunpack.c.l.b16 %v721
      %v801 = vunpack.c.l.b16 %v722
      %v802 = vunpack.c.l.b16 %v723
      %v803 = vunpack.c.l.b16 %v724
      %v804 = vunpack.c.l.b16 %v725
      %v805 = vunpack.c.l.b16 %v726
      %v806 = vunpack.c.l.b16 %v727
      %v807 = vunpack.c.l.b16 %v728
      %v808 = vunpack.c.l.b16 %v729
      %v809 = vunpack.c.l.b16 %v730
      %v810 = vunpack.c.l.b16 %v731
      %v811 = vunpack.c.l.b16 %v732
      %v812 = vunpack.c.l.b16 %v733
      %v813 = vunpack.c.l.b16 %v734
      %v814 = vunpack.c.l.b16 %v735
      %v815 = vpack.c.b16 %v780, %v779
      %v816 = vpack.c.b16 %v782, %v781
      %v817 = vpack.c.b16 %v784, %v783
      %v818 = vpack.c.b16 %v786, %v785
      %v819 = vpack.c.b16 %v788, %v787
      %v820 = vpack.c.b16 %v790, %v789
      %v821 = vpack.c.b16 %v792, %v791
      %v822 = vpack.c.b16 %v794, %v793
      %v823 = vpack.c.b16 %v796, %v795
      %v824 = vpack.c.b16 %v798, %v797
      %v825 = vpack.c.b16 %v800, %v799
      %v826 = vpack.c.b16 %v802, %v801
      %v827 = vpack.c.b16 %v804, %v803
      %v828 = vpack.c.b16 %v806, %v805
      %v829 = vpack.c.b16 %v808, %v807
      %v830 = vpack.c.b16 %v810, %v809
      %v831 = vpack.c.b16 %v812, %v811
      %v832 = vpack.c.b16 %v814, %v813
      %vm851 = vcmask 261120
      %v853 = vsel %vm851, %v684, 0
      %v856 = vsel %vm851, %v687, 0
      %v859 = vsel %vm851, %v690, 0
      %v862 = vsel %vm851, %v693, 0
      %v865 = vsel %vm851, %v696, 0
      %v868 = vsel %vm851, %v699, 0
      %870 = vmatprep.subr.bf16.mxu0 0
      %871 = vmatpush1.bf16.msra.mxu0 %v815
      %872 = vmatprep.subr.bf16.mxu0 0
      %873 = vmatpush1.bf16.msra.mxu0 %v816
      %874 = vmatprep.subr.bf16.mxu0 0
      %875 = vmatpush1.bf16.msra.mxu0 %v817
      %876 = vmatprep.subr.bf16.mxu0 0
      %877 = vmatpush1.bf16.msra.mxu0 %v818
      %878 = vmatprep.subr.bf16.mxu0 0
      %879 = vmatpush1.bf16.msra.mxu0 %v819
      %880 = vmatprep.subr.bf16.mxu0 0
      %881 = vmatpush1.bf16.msra.mxu0 %v820
      %882 = vmatprep.subr.bf16.mxu0 0
      %883 = vmatpush1.bf16.msra.mxu0 %v821
      %884 = vmatprep.subr.bf16.mxu0 0
      %885 = vmatpush1.bf16.msra.mxu0 %v822
      %886 = vmatprep.subr.bf16.mxu0 0
      %887 = vmatpush1.bf16.msra.mxu0 %v823
      %888 = vmatprep.subr.bf16.mxu0 0
      %889 = vmatpush1.bf16.msra.mxu0 %v824
      %890 = vmatprep.subr.bf16.mxu0 0
      %891 = vmatpush1.bf16.msra.mxu0 %v825
      %892 = vmatprep.subr.bf16.mxu0 0
      %893 = vmatpush1.bf16.msra.mxu0 %v826
      %894 = vmatprep.subr.bf16.mxu0 0
      %895 = vmatpush1.bf16.msra.mxu0 %v827
      %896 = vmatprep.subr.bf16.mxu0 0
      %897 = vmatpush1.bf16.msra.mxu0 %v828
      %898 = vmatprep.subr.bf16.mxu0 0
      %899 = vmatpush1.bf16.msra.mxu0 %v829
      %900 = vmatprep.subr.bf16.mxu0 0
      %901 = vmatpush1.bf16.msra.mxu0 %v830
      %902 = vmatprep.mubr.bf16.mxu0 %v683
      %903 = vmatmul.mubr.bf16.gmra.mrb[0].mxu0 %v682
      %v904 = vpop.f32.mrb[0].mxu0
      %v905 = vadd.f32 %v741, %v904
      %v906 = vpop.f32.mrb[0].mxu0
      %v907 = vpop.f32.mrb[0].mxu0
      %v908 = vadd.f32 %v741, %v907
      %v909 = vpop.f32.mrb[0].mxu0
      %910 = vmatprep.mubr.bf16.mxu0 %v686
      %911 = vmatmul.mubr.bf16.gmra.mrb[0].mxu0 %v685
      %v912 = vpop.f32.mrb[0].mxu0
      %v913 = vadd.f32 %v741, %v912
      %v914 = vpop.f32.mrb[0].mxu0
      %v915 = vpop.f32.mrb[0].mxu0
      %v916 = vadd.f32 %v741, %v915
      %v917 = vpop.f32.mrb[0].mxu0
      %918 = vmatprep.mubr.bf16.mxu0 %v689
      %919 = vmatmul.mubr.bf16.gmra.mrb[0].mxu0 %v688
      %v920 = vpop.f32.mrb[0].mxu0
      %v921 = vadd.f32 %v741, %v920
      %v922 = vpop.f32.mrb[0].mxu0
      %v923 = vpop.f32.mrb[0].mxu0
      %v924 = vadd.f32 %v741, %v923
      %v925 = vpop.f32.mrb[0].mxu0
      %926 = vmatprep.mubr.bf16.mxu0 %v692
      %927 = vmatmul.mubr.bf16.gmra.mrb[0].mxu0 %v691
      %v928 = vpop.f32.mrb[0].mxu0
      %v929 = vadd.f32 %v741, %v928
      %v930 = vpop.f32.mrb[0].mxu0
      %v931 = vpop.f32.mrb[0].mxu0
      %v932 = vadd.f32 %v741, %v931
      %v933 = vpop.f32.mrb[0].mxu0
      %934 = vmatprep.mubr.bf16.mxu0 %v695
      %935 = vmatmul.mubr.bf16.gmra.mrb[0].mxu0 %v694
      %v936 = vpop.f32.mrb[0].mxu0
      %v937 = vadd.f32 %v741, %v936
      %v938 = vpop.f32.mrb[0].mxu0
      %v939 = vpop.f32.mrb[0].mxu0
      %v940 = vadd.f32 %v741, %v939
      %v941 = vpop.f32.mrb[0].mxu0
      %942 = vmatprep.mubr.bf16.mxu0 %v698
      %943 = vmatmul.mubr.bf16.gmra.mrb[0].mxu0 %v697
      %v944 = vpop.f32.mrb[0].mxu0
      %v945 = vadd.f32 %v741, %v944
      %v946 = vpop.f32.mrb[0].mxu0
      %v947 = vpop.f32.mrb[0].mxu0
      %v948 = vadd.f32 %v741, %v947
      %v949 = vpop.f32.mrb[0].mxu0
      %950 = vdwg.mxu0
      %951 = vmatprep.subr.bf16.mxu0 0
      %952 = vmatpush1.bf16.msra.mxu0 %v831
      %953 = vmatprep.subr.bf16.mxu0 0
      %954 = vmatpush1.bf16.msra.mxu0 %v832
      %955 = vmatprep.subr.bf16.mxu0 0
      %956 = vmatpush1.bf16.msra.mxu0 0
      %957 = vmatprep.subr.bf16.mxu0 0
      %958 = vmatpush1.bf16.msra.mxu0 0
      %959 = vmatprep.subr.bf16.mxu0 0
      %960 = vmatpush1.bf16.msra.mxu0 0
      %961 = vmatprep.subr.bf16.mxu0 0
      %962 = vmatpush1.bf16.msra.mxu0 0
      %963 = vmatprep.subr.bf16.mxu0 0
      %964 = vmatpush1.bf16.msra.mxu0 0
      %965 = vmatprep.subr.bf16.mxu0 0
      %966 = vmatpush1.bf16.msra.mxu0 0
      %967 = vmatprep.subr.bf16.mxu0 0
      %968 = vmatpush1.bf16.msra.mxu0 0
      %969 = vmatprep.subr.bf16.mxu0 0
      %970 = vmatpush1.bf16.msra.mxu0 0
      %971 = vmatprep.subr.bf16.mxu0 0
      %972 = vmatpush1.bf16.msra.mxu0 0
      %973 = vmatprep.subr.bf16.mxu0 0
      %974 = vmatpush1.bf16.msra.mxu0 0
      %975 = vmatprep.subr.bf16.mxu0 0
      %976 = vmatpush1.bf16.msra.mxu0 0
      %977 = vmatprep.subr.bf16.mxu0 0
      %978 = vmatpush1.bf16.msra.mxu0 0
      %979 = vmatprep.subr.bf16.mxu0 0
      %980 = vmatpush1.bf16.msra.mxu0 0
      %981 = vmatprep.subr.bf16.mxu0 0
      %982 = vmatpush1.bf16.msra.mxu0 0
      %983 = vmatprep.mubr.bf16.mxu0 0
      %984 = vmatmul.mubr.bf16.gmra.mrb[0].mxu0 %v853
      %v985 = vpop.f32.mrb[0].mxu0
      %v986 = vadd.f32 %v905, %v985
      %v987 = vpop.f32.mrb[0].mxu0
      %v988 = vpop.f32.mrb[0].mxu0
      %v989 = vadd.f32 %v908, %v988
      %v990 = vpop.f32.mrb[0].mxu0
      %991 = vmatprep.mubr.bf16.mxu0 0
      %992 = vmatmul.mubr.bf16.gmra.mrb[0].mxu0 %v856
      %v993 = vpop.f32.mrb[0].mxu0
      %v994 = vadd.f32 %v913, %v993
      %v995 = vpop.f32.mrb[0].mxu0
      %v996 = vpop.f32.mrb[0].mxu0
      %v997 = vadd.f32 %v916, %v996
      %v998 = vpop.f32.mrb[0].mxu0
      %999 = vmatprep.mubr.bf16.mxu0 0
      %1000 = vmatmul.mubr.bf16.gmra.mrb[0].mxu0 %v859
      %v1001 = vpop.f32.mrb[0].mxu0
      %v1002 = vadd.f32 %v921, %v1001
      %v1003 = vpop.f32.mrb[0].mxu0
      %v1004 = vpop.f32.mrb[0].mxu0
      %v1005 = vadd.f32 %v924, %v1004
      %v1006 = vpop.f32.mrb[0].mxu0
      %1007 = vmatprep.mubr.bf16.mxu0 0
      %1008 = vmatmul.mubr.bf16.gmra.mrb[0].mxu0 %v862
      %v1009 = vpop.f32.mrb[0].mxu0
      %v1010 = vadd.f32 %v929, %v1009
      %v1011 = vpop.f32.mrb[0].mxu0
      %v1012 = vpop.f32.mrb[0].mxu0
      %v1013 = vadd.f32 %v932, %v1012
      %v1014 = vpop.f32.mrb[0].mxu0
      %1015 = vmatprep.mubr.bf16.mxu0 0
      %1016 = vmatmul.mubr.bf16.gmra.mrb[0].mxu0 %v865
      %v1017 = vpop.f32.mrb[0].mxu0
      %v1018 = vadd.f32 %v937, %v1017
      %v1019 = vpop.f32.mrb[0].mxu0
      %v1020 = vpop.f32.mrb[0].mxu0
      %v1021 = vadd.f32 %v940, %v1020
      %v1022 = vpop.f32.mrb[0].mxu0
      %1023 = vmatprep.mubr.bf16.mxu0 0
      %1024 = vmatmul.mubr.bf16.gmra.mrb[0].mxu0 %v868
      %v1025 = vpop.f32.mrb[0].mxu0
      %v1026 = vadd.f32 %v945, %v1025
      %v1027 = vpop.f32.mrb[0].mxu0
      %v1028 = vpop.f32.mrb[0].mxu0
      %v1029 = vadd.f32 %v948, %v1028
      %v1030 = vpop.f32.mrb[0].mxu0
      %1031 = vdwg.mxu0
      %v1032 = vmax.f32 %v986, 0.0
      %v1033 = vmax.f32 %v989, 0.0
      %v1034 = vmax.f32 %v994, 0.0
      %v1035 = vmax.f32 %v997, 0.0
      %v1036 = vmax.f32 %v1002, 0.0
      %v1037 = vmax.f32 %v1005, 0.0
      %v1038 = vmax.f32 %v1010, 0.0
      %v1039 = vmax.f32 %v1013, 0.0
      %v1040 = vmax.f32 %v1018, 0.0
      %v1041 = vmax.f32 %v1021, 0.0
      %v1042 = vmax.f32 %v1026, 0.0
      %v1043 = vmax.f32 %v1029, 0.0
      %v1044 = vpack.c.bf16 %v1032, %v1032
      %v1045 = vld [vmem:[%s3] sm:$0xf]
      %v1046 = vld [vmem:[%s3 + $0x4] sm:$0xf]
      %v1047 = vld [vmem:[%s3 + $0x8] sm:$0xf]
      %v1048 = vld [vmem:[%s3 + $0xc] sm:$0xf]
      %v1049 = vpack.c.bf16 %v1036, %v1036
      %s1050 = scalar_lea.vmem %s3, 64
      %v1051 = vld [vmem:[%s1050] sm:$0xf]
      %v1052 = vld [vmem:[%s1050 + $0x4] sm:$0xf]
      %v1053 = vld [vmem:[%s1050 + $0x8] sm:$0xf]
      %v1054 = vld [vmem:[%s1050 + $0xc] sm:$0xf]
      %v1059 = vunpack.c.l.b16 %v1051
      %v1060 = vunpack.c.l.b16 %v1052
      %v1061 = vunpack.c.l.b16 %v1053
      %v1062 = vunpack.c.l.b16 %v1054
      %v1063 = vpack.c.b16 %v1060, %v1059
      %v1064 = vpack.c.b16 %v1062, %v1061
      %v1068 = vsel %vm851, %v1049, 0
      %1070 = vmatprep.subr.bf16.mxu0 0
      %1071 = vmatpush1.bf16.msra.mxu0 %v1063
      %1072 = vmatprep.subr.bf16.mxu0 0
      %1073 = vmatpush1.bf16.msra.mxu0 %v1064
      %1074 = vmatprep.subr.bf16.mxu0 0
      %1075 = vmatpush1.bf16.msra.mxu0 0
      %1076 = vmatprep.subr.bf16.mxu0 0
      %1077 = vmatpush1.bf16.msra.mxu0 0
      %1078 = vmatprep.subr.bf16.mxu0 0
      %1079 = vmatpush1.bf16.msra.mxu0 0
      %1080 = vmatprep.subr.bf16.mxu0 0
      %1081 = vmatpush1.bf16.msra.mxu0 0
      %1082 = vmatprep.subr.bf16.mxu0 0
      %1083 = vmatpush1.bf16.msra.mxu0 0
      %1084 = vmatprep.subr.bf16.mxu0 0
      %1085 = vmatpush1.bf16.msra.mxu0 0
      %1086 = vmatprep.subr.bf16.mxu0 0
      %1087 = vmatpush1.bf16.msra.mxu0 0
      %1088 = vmatprep.subr.bf16.mxu0 0
      %1089 = vmatpush1.bf16.msra.mxu0 0
      %1090 = vmatprep.subr.bf16.mxu0 0
      %1091 = vmatpush1.bf16.msra.mxu0 0
      %1092 = vmatprep.subr.bf16.mxu0 0
      %1093 = vmatpush1.bf16.msra.mxu0 0
      %1094 = vmatprep.subr.bf16.mxu0 0
      %1095 = vmatpush1.bf16.msra.mxu0 0
      %1096 = vmatprep.subr.bf16.mxu0 0
      %1097 = vmatpush1.bf16.msra.mxu0 0
      %1098 = vmatprep.subr.bf16.mxu0 0
      %1099 = vmatpush1.bf16.msra.mxu0 0
      %1100 = vmatprep.subr.bf16.mxu0 0
      %1101 = vmatpush1.bf16.msra.mxu0 0
      %1102 = vmatprep.mubr.bf16.mxu0 0
      %1103 = vmatmul.mubr.bf16.gmra.mrb[0].mxu0 %v1068
      %v1104 = vpop.f32.mrb[0].mxu0
      %v1105 = vadd.f32 0.0, %v1104
      %v1106 = vpop.f32.mrb[0].mxu0
      %v1107 = vpop.f32.mrb[0].mxu0
      %v1108 = vpop.f32.mrb[0].mxu0
      %1109 = vdwg.mxu0
      %v1114 = vunpack.c.l.b16 %v1045
      %v1115 = vunpack.c.l.b16 %v1046
      %v1116 = vunpack.c.l.b16 %v1047
      %v1117 = vunpack.c.l.b16 %v1048
      %v1118 = vpack.c.b16 %v1115, %v1114
      %v1119 = vpack.c.b16 %v1117, %v1116
      %v1123 = vsel %vm851, %v1044, 0
      %1125 = vmatprep.subr.bf16.mxu0 0
      %1126 = vmatpush1.bf16.msra.mxu0 %v1118
      %1127 = vmatprep.subr.bf16.mxu0 0
      %1128 = vmatpush1.bf16.msra.mxu0 %v1119
      %1129 = vmatprep.subr.bf16.mxu0 0
      %1130 = vmatpush1.bf16.msra.mxu0 0
      %1131 = vmatprep.subr.bf16.mxu0 0
      %1132 = vmatpush1.bf16.msra.mxu0 0
      %1133 = vmatprep.subr.bf16.mxu0 0
      %1134 = vmatpush1.bf16.msra.mxu0 0
      %1135 = vmatprep.subr.bf16.mxu0 0
      %1136 = vmatpush1.bf16.msra.mxu0 0
      %1137 = vmatprep.subr.bf16.mxu0 0
      %1138 = vmatpush1.bf16.msra.mxu0 0
      %1139 = vmatprep.subr.bf16.mxu0 0
      %1140 = vmatpush1.bf16.msra.mxu0 0
      %1141 = vmatprep.subr.bf16.mxu0 0
      %1142 = vmatpush1.bf16.msra.mxu0 0
      %1143 = vmatprep.subr.bf16.mxu0 0
      %1144 = vmatpush1.bf16.msra.mxu0 0
      %1145 = vmatprep.subr.bf16.mxu0 0
      %1146 = vmatpush1.bf16.msra.mxu0 0
      %1147 = vmatprep.subr.bf16.mxu0 0
      %1148 = vmatpush1.bf16.msra.mxu0 0
      %1149 = vmatprep.subr.bf16.mxu0 0
      %1150 = vmatpush1.bf16.msra.mxu0 0
      %1151 = vmatprep.subr.bf16.mxu0 0
      %1152 = vmatpush1.bf16.msra.mxu0 0
      %1153 = vmatprep.subr.bf16.mxu0 0
      %1154 = vmatpush1.bf16.msra.mxu0 0
      %1155 = vmatprep.subr.bf16.mxu0 0
      %1156 = vmatpush1.bf16.msra.mxu0 0
      %1157 = vmatprep.mubr.bf16.mxu0 0
      %1158 = vmatmul.mubr.bf16.gmra.mrb[0].mxu0 %v1123
      %v1159 = vpop.f32.mrb[0].mxu0
      %v1160 = vadd.f32 %v1105, %v1159
      %v1161 = vpop.f32.mrb[0].mxu0
      %v1162 = vpop.f32.mrb[0].mxu0
      %v1163 = vpop.f32.mrb[0].mxu0
      %1164 = vdwg.mxu0
      %v1165 = vpack.c.bf16 %v1040, %v1040
      %s1166 = scalar_lea.vmem %s3, 128
      %v1167 = vld [vmem:[%s1166] sm:$0xf]
      %v1168 = vld [vmem:[%s1166 + $0x4] sm:$0xf]
      %v1169 = vld [vmem:[%s1166 + $0x8] sm:$0xf]
      %v1170 = vld [vmem:[%s1166 + $0xc] sm:$0xf]
      %v1175 = vunpack.c.l.b16 %v1167
      %v1176 = vunpack.c.l.b16 %v1168
      %v1177 = vunpack.c.l.b16 %v1169
      %v1178 = vunpack.c.l.b16 %v1170
      %v1179 = vpack.c.b16 %v1176, %v1175
      %v1180 = vpack.c.b16 %v1178, %v1177
      %v1184 = vsel %vm851, %v1165, 0
      %1186 = vmatprep.subr.bf16.mxu0 0
      %1187 = vmatpush1.bf16.msra.mxu0 %v1179
      %1188 = vmatprep.subr.bf16.mxu0 0
      %1189 = vmatpush1.bf16.msra.mxu0 %v1180
      %1190 = vmatprep.subr.bf16.mxu0 0
      %1191 = vmatpush1.bf16.msra.mxu0 0
      %1192 = vmatprep.subr.bf16.mxu0 0
      %1193 = vmatpush1.bf16.msra.mxu0 0
      %1194 = vmatprep.subr.bf16.mxu0 0
      %1195 = vmatpush1.bf16.msra.mxu0 0
      %1196 = vmatprep.subr.bf16.mxu0 0
      %1197 = vmatpush1.bf16.msra.mxu0 0
      %1198 = vmatprep.subr.bf16.mxu0 0
      %1199 = vmatpush1.bf16.msra.mxu0 0
      %1200 = vmatprep.subr.bf16.mxu0 0
      %1201 = vmatpush1.bf16.msra.mxu0 0
      %1202 = vmatprep.subr.bf16.mxu0 0
      %1203 = vmatpush1.bf16.msra.mxu0 0
      %1204 = vmatprep.subr.bf16.mxu0 0
      %1205 = vmatpush1.bf16.msra.mxu0 0
      %1206 = vmatprep.subr.bf16.mxu0 0
      %1207 = vmatpush1.bf16.msra.mxu0 0
      %1208 = vmatprep.subr.bf16.mxu0 0
      %1209 = vmatpush1.bf16.msra.mxu0 0
      %1210 = vmatprep.subr.bf16.mxu0 0
      %1211 = vmatpush1.bf16.msra.mxu0 0
      %1212 = vmatprep.subr.bf16.mxu0 0
      %1213 = vmatpush1.bf16.msra.mxu0 0
      %1214 = vmatprep.subr.bf16.mxu0 0
      %1215 = vmatpush1.bf16.msra.mxu0 0
      %1216 = vmatprep.subr.bf16.mxu0 0
      %1217 = vmatpush1.bf16.msra.mxu0 0
      %1218 = vmatprep.mubr.bf16.mxu0 0
      %1219 = vmatmul.mubr.bf16.gmra.mrb[0].mxu0 %v1184
      %v1220 = vpop.f32.mrb[0].mxu0
      %v1221 = vadd.f32 0.0, %v1220
      %v1222 = vpop.f32.mrb[0].mxu0
      %v1223 = vpop.f32.mrb[0].mxu0
      %v1224 = vpop.f32.mrb[0].mxu0
      %1225 = vdwg.mxu0
      %v1226 = vadd.f32 %v1160, %v1221
      %v1227 = vpack.c.bf16 %v1033, %v1033
      %s1228 = scalar_lea.vmem %s3, 16
      %v1229 = vld [vmem:[%s1228] sm:$0xf]
      %v1230 = vld [vmem:[%s1228 + $0x4] sm:$0xf]
      %v1231 = vld [vmem:[%s1228 + $0x8] sm:$0xf]
      %v1232 = vld [vmem:[%s1228 + $0xc] sm:$0xf]
      %v1237 = vunpack.c.l.b16 %v1229
      %v1238 = vunpack.c.l.b16 %v1230
      %v1239 = vunpack.c.l.b16 %v1231
      %v1240 = vunpack.c.l.b16 %v1232
      %v1241 = vpack.c.b16 %v1238, %v1237
      %v1242 = vpack.c.b16 %v1240, %v1239
      %v1246 = vsel %vm851, %v1227, 0
      %1248 = vmatprep.subr.bf16.mxu0 0
      %1249 = vmatpush1.bf16.msra.mxu0 %v1241
      %1250 = vmatprep.subr.bf16.mxu0 0
      %1251 = vmatpush1.bf16.msra.mxu0 %v1242
      %1252 = vmatprep.subr.bf16.mxu0 0
      %1253 = vmatpush1.bf16.msra.mxu0 0
      %1254 = vmatprep.subr.bf16.mxu0 0
      %1255 = vmatpush1.bf16.msra.mxu0 0
      %1256 = vmatprep.subr.bf16.mxu0 0
      %1257 = vmatpush1.bf16.msra.mxu0 0
      %1258 = vmatprep.subr.bf16.mxu0 0
      %1259 = vmatpush1.bf16.msra.mxu0 0
      %1260 = vmatprep.subr.bf16.mxu0 0
      %1261 = vmatpush1.bf16.msra.mxu0 0
      %1262 = vmatprep.subr.bf16.mxu0 0
      %1263 = vmatpush1.bf16.msra.mxu0 0
      %1264 = vmatprep.subr.bf16.mxu0 0
      %1265 = vmatpush1.bf16.msra.mxu0 0
      %1266 = vmatprep.subr.bf16.mxu0 0
      %1267 = vmatpush1.bf16.msra.mxu0 0
      %1268 = vmatprep.subr.bf16.mxu0 0
      %1269 = vmatpush1.bf16.msra.mxu0 0
      %1270 = vmatprep.subr.bf16.mxu0 0
      %1271 = vmatpush1.bf16.msra.mxu0 0
      %1272 = vmatprep.subr.bf16.mxu0 0
      %1273 = vmatpush1.bf16.msra.mxu0 0
      %1274 = vmatprep.subr.bf16.mxu0 0
      %1275 = vmatpush1.bf16.msra.mxu0 0
      %1276 = vmatprep.subr.bf16.mxu0 0
      %1277 = vmatpush1.bf16.msra.mxu0 0
      %1278 = vmatprep.subr.bf16.mxu0 0
      %1279 = vmatpush1.bf16.msra.mxu0 0
      %1280 = vmatprep.mubr.bf16.mxu0 0
      %1281 = vmatmul.mubr.bf16.gmra.mrb[0].mxu0 %v1246
      %v1282 = vpop.f32.mrb[0].mxu0
      %v1283 = vadd.f32 0.0, %v1282
      %v1284 = vpop.f32.mrb[0].mxu0
      %v1285 = vpop.f32.mrb[0].mxu0
      %v1286 = vpop.f32.mrb[0].mxu0
      %1287 = vdwg.mxu0
      %v1288 = vadd.f32 %v1226, %v1283
      %v1289 = vpack.c.bf16 %v1037, %v1037
      %s1290 = scalar_lea.vmem %s3, 80
      %v1291 = vld [vmem:[%s1290] sm:$0xf]
      %v1292 = vld [vmem:[%s1290 + $0x4] sm:$0xf]
      %v1293 = vld [vmem:[%s1290 + $0x8] sm:$0xf]
      %v1294 = vld [vmem:[%s1290 + $0xc] sm:$0xf]
      %v1299 = vunpack.c.l.b16 %v1291
      %v1300 = vunpack.c.l.b16 %v1292
      %v1301 = vunpack.c.l.b16 %v1293
      %v1302 = vunpack.c.l.b16 %v1294
      %v1303 = vpack.c.b16 %v1300, %v1299
      %v1304 = vpack.c.b16 %v1302, %v1301
      %v1308 = vsel %vm851, %v1289, 0
      %1310 = vmatprep.subr.bf16.mxu0 0
      %1311 = vmatpush1.bf16.msra.mxu0 %v1303
      %1312 = vmatprep.subr.bf16.mxu0 0
      %1313 = vmatpush1.bf16.msra.mxu0 %v1304
      %1314 = vmatprep.subr.bf16.mxu0 0
      %1315 = vmatpush1.bf16.msra.mxu0 0
      %1316 = vmatprep.subr.bf16.mxu0 0
      %1317 = vmatpush1.bf16.msra.mxu0 0
      %1318 = vmatprep.subr.bf16.mxu0 0
      %1319 = vmatpush1.bf16.msra.mxu0 0
      %1320 = vmatprep.subr.bf16.mxu0 0
      %1321 = vmatpush1.bf16.msra.mxu0 0
      %1322 = vmatprep.subr.bf16.mxu0 0
      %1323 = vmatpush1.bf16.msra.mxu0 0
      %1324 = vmatprep.subr.bf16.mxu0 0
      %1325 = vmatpush1.bf16.msra.mxu0 0
      %1326 = vmatprep.subr.bf16.mxu0 0
      %1327 = vmatpush1.bf16.msra.mxu0 0
      %1328 = vmatprep.subr.bf16.mxu0 0
      %1329 = vmatpush1.bf16.msra.mxu0 0
      %1330 = vmatprep.subr.bf16.mxu0 0
      %1331 = vmatpush1.bf16.msra.mxu0 0
      %1332 = vmatprep.subr.bf16.mxu0 0
      %1333 = vmatpush1.bf16.msra.mxu0 0
      %1334 = vmatprep.subr.bf16.mxu0 0
      %1335 = vmatpush1.bf16.msra.mxu0 0
      %1336 = vmatprep.subr.bf16.mxu0 0
      %1337 = vmatpush1.bf16.msra.mxu0 0
      %1338 = vmatprep.subr.bf16.mxu0 0
      %1339 = vmatpush1.bf16.msra.mxu0 0
      %1340 = vmatprep.subr.bf16.mxu0 0
      %1341 = vmatpush1.bf16.msra.mxu0 0
      %1342 = vmatprep.mubr.bf16.mxu0 0
      %1343 = vmatmul.mubr.bf16.gmra.mrb[0].mxu0 %v1308
      %v1344 = vpop.f32.mrb[0].mxu0
      %v1345 = vadd.f32 0.0, %v1344
      %v1346 = vpop.f32.mrb[0].mxu0
      %v1347 = vpop.f32.mrb[0].mxu0
      %v1348 = vpop.f32.mrb[0].mxu0
      %1349 = vdwg.mxu0
      %v1350 = vadd.f32 %v1288, %v1345
      %v1351 = vpack.c.bf16 %v1041, %v1041
      %s1352 = scalar_lea.vmem %s3, 144
      %v1353 = vld [vmem:[%s1352] sm:$0xf]
      %v1354 = vld [vmem:[%s1352 + $0x4] sm:$0xf]
      %v1355 = vld [vmem:[%s1352 + $0x8] sm:$0xf]
      %v1356 = vld [vmem:[%s1352 + $0xc] sm:$0xf]
      %v1361 = vunpack.c.l.b16 %v1353
      %v1362 = vunpack.c.l.b16 %v1354
      %v1363 = vunpack.c.l.b16 %v1355
      %v1364 = vunpack.c.l.b16 %v1356
      %v1365 = vpack.c.b16 %v1362, %v1361
      %v1366 = vpack.c.b16 %v1364, %v1363
      %v1370 = vsel %vm851, %v1351, 0
      %1372 = vmatprep.subr.bf16.mxu0 0
      %1373 = vmatpush1.bf16.msra.mxu0 %v1365
      %1374 = vmatprep.subr.bf16.mxu0 0
      %1375 = vmatpush1.bf16.msra.mxu0 %v1366
      %1376 = vmatprep.subr.bf16.mxu0 0
      %1377 = vmatpush1.bf16.msra.mxu0 0
      %1378 = vmatprep.subr.bf16.mxu0 0
      %1379 = vmatpush1.bf16.msra.mxu0 0
      %1380 = vmatprep.subr.bf16.mxu0 0
      %1381 = vmatpush1.bf16.msra.mxu0 0
      %1382 = vmatprep.subr.bf16.mxu0 0
      %1383 = vmatpush1.bf16.msra.mxu0 0
      %1384 = vmatprep.subr.bf16.mxu0 0
      %1385 = vmatpush1.bf16.msra.mxu0 0
      %1386 = vmatprep.subr.bf16.mxu0 0
      %1387 = vmatpush1.bf16.msra.mxu0 0
      %1388 = vmatprep.subr.bf16.mxu0 0
      %1389 = vmatpush1.bf16.msra.mxu0 0
      %1390 = vmatprep.subr.bf16.mxu0 0
      %1391 = vmatpush1.bf16.msra.mxu0 0
      %1392 = vmatprep.subr.bf16.mxu0 0
      %1393 = vmatpush1.bf16.msra.mxu0 0
      %1394 = vmatprep.subr.bf16.mxu0 0
      %1395 = vmatpush1.bf16.msra.mxu0 0
      %1396 = vmatprep.subr.bf16.mxu0 0
      %1397 = vmatpush1.bf16.msra.mxu0 0
      %1398 = vmatprep.subr.bf16.mxu0 0
      %1399 = vmatpush1.bf16.msra.mxu0 0
      %1400 = vmatprep.subr.bf16.mxu0 0
      %1401 = vmatpush1.bf16.msra.mxu0 0
      %1402 = vmatprep.subr.bf16.mxu0 0
      %1403 = vmatpush1.bf16.msra.mxu0 0
      %1404 = vmatprep.mubr.bf16.mxu0 0
      %1405 = vmatmul.mubr.bf16.gmra.mrb[0].mxu0 %v1370
      %v1406 = vpop.f32.mrb[0].mxu0
      %v1407 = vadd.f32 0.0, %v1406
      %v1408 = vpop.f32.mrb[0].mxu0
      %v1409 = vpop.f32.mrb[0].mxu0
      %v1410 = vpop.f32.mrb[0].mxu0
      %1411 = vdwg.mxu0
      %v1412 = vadd.f32 %v1350, %v1407
      %v1413 = vpack.c.bf16 %v1034, %v1034
      %s1414 = scalar_lea.vmem %s3, 32
      %v1415 = vld [vmem:[%s1414] sm:$0xf]
      %v1416 = vld [vmem:[%s1414 + $0x4] sm:$0xf]
      %v1417 = vld [vmem:[%s1414 + $0x8] sm:$0xf]
      %v1418 = vld [vmem:[%s1414 + $0xc] sm:$0xf]
      %v1423 = vunpack.c.l.b16 %v1415
      %v1424 = vunpack.c.l.b16 %v1416
      %v1425 = vunpack.c.l.b16 %v1417
      %v1426 = vunpack.c.l.b16 %v1418
      %v1427 = vpack.c.b16 %v1424, %v1423
      %v1428 = vpack.c.b16 %v1426, %v1425
      %v1432 = vsel %vm851, %v1413, 0
      %1434 = vmatprep.subr.bf16.mxu0 0
      %1435 = vmatpush1.bf16.msra.mxu0 %v1427
      %1436 = vmatprep.subr.bf16.mxu0 0
      %1437 = vmatpush1.bf16.msra.mxu0 %v1428
      %1438 = vmatprep.subr.bf16.mxu0 0
      %1439 = vmatpush1.bf16.msra.mxu0 0
      %1440 = vmatprep.subr.bf16.mxu0 0
      %1441 = vmatpush1.bf16.msra.mxu0 0
      %1442 = vmatprep.subr.bf16.mxu0 0
      %1443 = vmatpush1.bf16.msra.mxu0 0
      %1444 = vmatprep.subr.bf16.mxu0 0
      %1445 = vmatpush1.bf16.msra.mxu0 0
      %1446 = vmatprep.subr.bf16.mxu0 0
      %1447 = vmatpush1.bf16.msra.mxu0 0
      %1448 = vmatprep.subr.bf16.mxu0 0
      %1449 = vmatpush1.bf16.msra.mxu0 0
      %1450 = vmatprep.subr.bf16.mxu0 0
      %1451 = vmatpush1.bf16.msra.mxu0 0
      %1452 = vmatprep.subr.bf16.mxu0 0
      %1453 = vmatpush1.bf16.msra.mxu0 0
      %1454 = vmatprep.subr.bf16.mxu0 0
      %1455 = vmatpush1.bf16.msra.mxu0 0
      %1456 = vmatprep.subr.bf16.mxu0 0
      %1457 = vmatpush1.bf16.msra.mxu0 0
      %1458 = vmatprep.subr.bf16.mxu0 0
      %1459 = vmatpush1.bf16.msra.mxu0 0
      %1460 = vmatprep.subr.bf16.mxu0 0
      %1461 = vmatpush1.bf16.msra.mxu0 0
      %1462 = vmatprep.subr.bf16.mxu0 0
      %1463 = vmatpush1.bf16.msra.mxu0 0
      %1464 = vmatprep.subr.bf16.mxu0 0
      %1465 = vmatpush1.bf16.msra.mxu0 0
      %1466 = vmatprep.mubr.bf16.mxu0 0
      %1467 = vmatmul.mubr.bf16.gmra.mrb[0].mxu0 %v1432
      %v1468 = vpop.f32.mrb[0].mxu0
      %v1469 = vadd.f32 0.0, %v1468
      %v1470 = vpop.f32.mrb[0].mxu0
      %v1471 = vpop.f32.mrb[0].mxu0
      %v1472 = vpop.f32.mrb[0].mxu0
      %1473 = vdwg.mxu0
      %v1474 = vadd.f32 %v1412, %v1469
      %v1475 = vpack.c.bf16 %v1038, %v1038
      %s1476 = scalar_lea.vmem %s3, 96
      %v1477 = vld [vmem:[%s1476] sm:$0xf]
      %v1478 = vld [vmem:[%s1476 + $0x4] sm:$0xf]
      %v1479 = vld [vmem:[%s1476 + $0x8] sm:$0xf]
      %v1480 = vld [vmem:[%s1476 + $0xc] sm:$0xf]
      %v1485 = vunpack.c.l.b16 %v1477
      %v1486 = vunpack.c.l.b16 %v1478
      %v1487 = vunpack.c.l.b16 %v1479
      %v1488 = vunpack.c.l.b16 %v1480
      %v1489 = vpack.c.b16 %v1486, %v1485
      %v1490 = vpack.c.b16 %v1488, %v1487
      %v1494 = vsel %vm851, %v1475, 0
      %1496 = vmatprep.subr.bf16.mxu0 0
      %1497 = vmatpush1.bf16.msra.mxu0 %v1489
      %1498 = vmatprep.subr.bf16.mxu0 0
      %1499 = vmatpush1.bf16.msra.mxu0 %v1490
      %1500 = vmatprep.subr.bf16.mxu0 0
      %1501 = vmatpush1.bf16.msra.mxu0 0
      %1502 = vmatprep.subr.bf16.mxu0 0
      %1503 = vmatpush1.bf16.msra.mxu0 0
      %1504 = vmatprep.subr.bf16.mxu0 0
      %1505 = vmatpush1.bf16.msra.mxu0 0
      %1506 = vmatprep.subr.bf16.mxu0 0
      %1507 = vmatpush1.bf16.msra.mxu0 0
      %1508 = vmatprep.subr.bf16.mxu0 0
      %1509 = vmatpush1.bf16.msra.mxu0 0
      %1510 = vmatprep.subr.bf16.mxu0 0
      %1511 = vmatpush1.bf16.msra.mxu0 0
      %1512 = vmatprep.subr.bf16.mxu0 0
      %1513 = vmatpush1.bf16.msra.mxu0 0
      %1514 = vmatprep.subr.bf16.mxu0 0
      %1515 = vmatpush1.bf16.msra.mxu0 0
      %1516 = vmatprep.subr.bf16.mxu0 0
      %1517 = vmatpush1.bf16.msra.mxu0 0
      %1518 = vmatprep.subr.bf16.mxu0 0
      %1519 = vmatpush1.bf16.msra.mxu0 0
      %1520 = vmatprep.subr.bf16.mxu0 0
      %1521 = vmatpush1.bf16.msra.mxu0 0
      %1522 = vmatprep.subr.bf16.mxu0 0
      %1523 = vmatpush1.bf16.msra.mxu0 0
      %1524 = vmatprep.subr.bf16.mxu0 0
      %1525 = vmatpush1.bf16.msra.mxu0 0
      %1526 = vmatprep.subr.bf16.mxu0 0
      %1527 = vmatpush1.bf16.msra.mxu0 0
      %1528 = vmatprep.mubr.bf16.mxu0 0
      %1529 = vmatmul.mubr.bf16.gmra.mrb[0].mxu0 %v1494
      %v1530 = vpop.f32.mrb[0].mxu0
      %v1531 = vadd.f32 0.0, %v1530
      %v1532 = vpop.f32.mrb[0].mxu0
      %v1533 = vpop.f32.mrb[0].mxu0
      %v1534 = vpop.f32.mrb[0].mxu0
      %1535 = vdwg.mxu0
      %v1536 = vadd.f32 %v1474, %v1531
      %v1537 = vpack.c.bf16 %v1042, %v1042
      %s1538 = scalar_lea.vmem %s3, 160
      %v1539 = vld [vmem:[%s1538] sm:$0xf]
      %v1540 = vld [vmem:[%s1538 + $0x4] sm:$0xf]
      %v1541 = vld [vmem:[%s1538 + $0x8] sm:$0xf]
      %v1542 = vld [vmem:[%s1538 + $0xc] sm:$0xf]
      %v1547 = vunpack.c.l.b16 %v1539
      %v1548 = vunpack.c.l.b16 %v1540
      %v1549 = vunpack.c.l.b16 %v1541
      %v1550 = vunpack.c.l.b16 %v1542
      %v1551 = vpack.c.b16 %v1548, %v1547
      %v1552 = vpack.c.b16 %v1550, %v1549
      %v1556 = vsel %vm851, %v1537, 0
      %1558 = vmatprep.subr.bf16.mxu0 0
      %1559 = vmatpush1.bf16.msra.mxu0 %v1551
      %1560 = vmatprep.subr.bf16.mxu0 0
      %1561 = vmatpush1.bf16.msra.mxu0 %v1552
      %1562 = vmatprep.subr.bf16.mxu0 0
      %1563 = vmatpush1.bf16.msra.mxu0 0
      %1564 = vmatprep.subr.bf16.mxu0 0
      %1565 = vmatpush1.bf16.msra.mxu0 0
      %1566 = vmatprep.subr.bf16.mxu0 0
      %1567 = vmatpush1.bf16.msra.mxu0 0
      %1568 = vmatprep.subr.bf16.mxu0 0
      %1569 = vmatpush1.bf16.msra.mxu0 0
      %1570 = vmatprep.subr.bf16.mxu0 0
      %1571 = vmatpush1.bf16.msra.mxu0 0
      %1572 = vmatprep.subr.bf16.mxu0 0
      %1573 = vmatpush1.bf16.msra.mxu0 0
      %1574 = vmatprep.subr.bf16.mxu0 0
      %1575 = vmatpush1.bf16.msra.mxu0 0
      %1576 = vmatprep.subr.bf16.mxu0 0
      %1577 = vmatpush1.bf16.msra.mxu0 0
      %1578 = vmatprep.subr.bf16.mxu0 0
      %1579 = vmatpush1.bf16.msra.mxu0 0
      %1580 = vmatprep.subr.bf16.mxu0 0
      %1581 = vmatpush1.bf16.msra.mxu0 0
      %1582 = vmatprep.subr.bf16.mxu0 0
      %1583 = vmatpush1.bf16.msra.mxu0 0
      %1584 = vmatprep.subr.bf16.mxu0 0
      %1585 = vmatpush1.bf16.msra.mxu0 0
      %1586 = vmatprep.subr.bf16.mxu0 0
      %1587 = vmatpush1.bf16.msra.mxu0 0
      %1588 = vmatprep.subr.bf16.mxu0 0
      %1589 = vmatpush1.bf16.msra.mxu0 0
      %1590 = vmatprep.mubr.bf16.mxu0 0
      %1591 = vmatmul.mubr.bf16.gmra.mrb[0].mxu0 %v1556
      %v1592 = vpop.f32.mrb[0].mxu0
      %v1593 = vadd.f32 0.0, %v1592
      %v1594 = vpop.f32.mrb[0].mxu0
      %v1595 = vpop.f32.mrb[0].mxu0
      %v1596 = vpop.f32.mrb[0].mxu0
      %1597 = vdwg.mxu0
      %v1598 = vadd.f32 %v1536, %v1593
      %v1599 = vpack.c.bf16 %v1035, %v1035
      %s1600 = scalar_lea.vmem %s3, 48
      %v1601 = vld [vmem:[%s1600] sm:$0xf]
      %v1602 = vld [vmem:[%s1600 + $0x4] sm:$0xf]
      %v1603 = vld [vmem:[%s1600 + $0x8] sm:$0xf]
      %v1604 = vld [vmem:[%s1600 + $0xc] sm:$0xf]
      %v1609 = vunpack.c.l.b16 %v1601
      %v1610 = vunpack.c.l.b16 %v1602
      %v1611 = vunpack.c.l.b16 %v1603
      %v1612 = vunpack.c.l.b16 %v1604
      %v1613 = vpack.c.b16 %v1610, %v1609
      %v1614 = vpack.c.b16 %v1612, %v1611
      %v1618 = vsel %vm851, %v1599, 0
      %1620 = vmatprep.subr.bf16.mxu0 0
      %1621 = vmatpush1.bf16.msra.mxu0 %v1613
      %1622 = vmatprep.subr.bf16.mxu0 0
      %1623 = vmatpush1.bf16.msra.mxu0 %v1614
      %1624 = vmatprep.subr.bf16.mxu0 0
      %1625 = vmatpush1.bf16.msra.mxu0 0
      %1626 = vmatprep.subr.bf16.mxu0 0
      %1627 = vmatpush1.bf16.msra.mxu0 0
      %1628 = vmatprep.subr.bf16.mxu0 0
      %1629 = vmatpush1.bf16.msra.mxu0 0
      %1630 = vmatprep.subr.bf16.mxu0 0
      %1631 = vmatpush1.bf16.msra.mxu0 0
      %1632 = vmatprep.subr.bf16.mxu0 0
      %1633 = vmatpush1.bf16.msra.mxu0 0
      %1634 = vmatprep.subr.bf16.mxu0 0
      %1635 = vmatpush1.bf16.msra.mxu0 0
      %1636 = vmatprep.subr.bf16.mxu0 0
      %1637 = vmatpush1.bf16.msra.mxu0 0
      %1638 = vmatprep.subr.bf16.mxu0 0
      %1639 = vmatpush1.bf16.msra.mxu0 0
      %1640 = vmatprep.subr.bf16.mxu0 0
      %1641 = vmatpush1.bf16.msra.mxu0 0
      %1642 = vmatprep.subr.bf16.mxu0 0
      %1643 = vmatpush1.bf16.msra.mxu0 0
      %1644 = vmatprep.subr.bf16.mxu0 0
      %1645 = vmatpush1.bf16.msra.mxu0 0
      %1646 = vmatprep.subr.bf16.mxu0 0
      %1647 = vmatpush1.bf16.msra.mxu0 0
      %1648 = vmatprep.subr.bf16.mxu0 0
      %1649 = vmatpush1.bf16.msra.mxu0 0
      %1650 = vmatprep.subr.bf16.mxu0 0
      %1651 = vmatpush1.bf16.msra.mxu0 0
      %1652 = vmatprep.mubr.bf16.mxu0 0
      %1653 = vmatmul.mubr.bf16.gmra.mrb[0].mxu0 %v1618
      %v1654 = vpop.f32.mrb[0].mxu0
      %v1655 = vadd.f32 0.0, %v1654
      %v1656 = vpop.f32.mrb[0].mxu0
      %v1657 = vpop.f32.mrb[0].mxu0
      %v1658 = vpop.f32.mrb[0].mxu0
      %1659 = vdwg.mxu0
      %v1660 = vadd.f32 %v1598, %v1655
      %v1661 = vpack.c.bf16 %v1039, %v1039
      %s1662 = scalar_lea.vmem %s3, 112
      %v1663 = vld [vmem:[%s1662] sm:$0xf]
      %v1664 = vld [vmem:[%s1662 + $0x4] sm:$0xf]
      %v1665 = vld [vmem:[%s1662 + $0x8] sm:$0xf]
      %v1666 = vld [vmem:[%s1662 + $0xc] sm:$0xf]
      %v1671 = vunpack.c.l.b16 %v1663
      %v1672 = vunpack.c.l.b16 %v1664
      %v1673 = vunpack.c.l.b16 %v1665
      %v1674 = vunpack.c.l.b16 %v1666
      %v1675 = vpack.c.b16 %v1672, %v1671
      %v1676 = vpack.c.b16 %v1674, %v1673
      %v1680 = vsel %vm851, %v1661, 0
      %1682 = vmatprep.subr.bf16.mxu0 0
      %1683 = vmatpush1.bf16.msra.mxu0 %v1675
      %1684 = vmatprep.subr.bf16.mxu0 0
      %1685 = vmatpush1.bf16.msra.mxu0 %v1676
      %1686 = vmatprep.subr.bf16.mxu0 0
      %1687 = vmatpush1.bf16.msra.mxu0 0
      %1688 = vmatprep.subr.bf16.mxu0 0
      %1689 = vmatpush1.bf16.msra.mxu0 0
      %1690 = vmatprep.subr.bf16.mxu0 0
      %1691 = vmatpush1.bf16.msra.mxu0 0
      %1692 = vmatprep.subr.bf16.mxu0 0
      %1693 = vmatpush1.bf16.msra.mxu0 0
      %1694 = vmatprep.subr.bf16.mxu0 0
      %1695 = vmatpush1.bf16.msra.mxu0 0
      %1696 = vmatprep.subr.bf16.mxu0 0
      %1697 = vmatpush1.bf16.msra.mxu0 0
      %1698 = vmatprep.subr.bf16.mxu0 0
      %1699 = vmatpush1.bf16.msra.mxu0 0
      %1700 = vmatprep.subr.bf16.mxu0 0
      %1701 = vmatpush1.bf16.msra.mxu0 0
      %1702 = vmatprep.subr.bf16.mxu0 0
      %1703 = vmatpush1.bf16.msra.mxu0 0
      %1704 = vmatprep.subr.bf16.mxu0 0
      %1705 = vmatpush1.bf16.msra.mxu0 0
      %1706 = vmatprep.subr.bf16.mxu0 0
      %1707 = vmatpush1.bf16.msra.mxu0 0
      %1708 = vmatprep.subr.bf16.mxu0 0
      %1709 = vmatpush1.bf16.msra.mxu0 0
      %1710 = vmatprep.subr.bf16.mxu0 0
      %1711 = vmatpush1.bf16.msra.mxu0 0
      %1712 = vmatprep.subr.bf16.mxu0 0
      %1713 = vmatpush1.bf16.msra.mxu0 0
      %1714 = vmatprep.mubr.bf16.mxu0 0
      %1715 = vmatmul.mubr.bf16.gmra.mrb[0].mxu0 %v1680
      %v1716 = vpop.f32.mrb[0].mxu0
      %v1717 = vadd.f32 0.0, %v1716
      %v1718 = vpop.f32.mrb[0].mxu0
      %v1719 = vpop.f32.mrb[0].mxu0
      %v1720 = vpop.f32.mrb[0].mxu0
      %1721 = vdwg.mxu0
      %v1722 = vadd.f32 %v1660, %v1717
      %v1723 = vpack.c.bf16 %v1043, %v1043
      %s1724 = scalar_lea.vmem %s3, 176
      %v1725 = vld [vmem:[%s1724] sm:$0xf]
      %v1726 = vld [vmem:[%s1724 + $0x4] sm:$0xf]
      %v1727 = vld [vmem:[%s1724 + $0x8] sm:$0xf]
      %v1728 = vld [vmem:[%s1724 + $0xc] sm:$0xf]
      %v1733 = vunpack.c.l.b16 %v1725
      %v1734 = vunpack.c.l.b16 %v1726
      %v1735 = vunpack.c.l.b16 %v1727
      %v1736 = vunpack.c.l.b16 %v1728
      %v1737 = vpack.c.b16 %v1734, %v1733
      %v1738 = vpack.c.b16 %v1736, %v1735
      %v1742 = vsel %vm851, %v1723, 0
      %1744 = vmatprep.subr.bf16.mxu0 0
      %1745 = vmatpush1.bf16.msra.mxu0 %v1737
      %1746 = vmatprep.subr.bf16.mxu0 0
      %1747 = vmatpush1.bf16.msra.mxu0 %v1738
      %1748 = vmatprep.subr.bf16.mxu0 0
      %1749 = vmatpush1.bf16.msra.mxu0 0
      %1750 = vmatprep.subr.bf16.mxu0 0
      %1751 = vmatpush1.bf16.msra.mxu0 0
      %1752 = vmatprep.subr.bf16.mxu0 0
      %1753 = vmatpush1.bf16.msra.mxu0 0
      %1754 = vmatprep.subr.bf16.mxu0 0
      %1755 = vmatpush1.bf16.msra.mxu0 0
      %1756 = vmatprep.subr.bf16.mxu0 0
      %1757 = vmatpush1.bf16.msra.mxu0 0
      %1758 = vmatprep.subr.bf16.mxu0 0
      %1759 = vmatpush1.bf16.msra.mxu0 0
      %1760 = vmatprep.subr.bf16.mxu0 0
      %1761 = vmatpush1.bf16.msra.mxu0 0
      %1762 = vmatprep.subr.bf16.mxu0 0
      %1763 = vmatpush1.bf16.msra.mxu0 0
      %1764 = vmatprep.subr.bf16.mxu0 0
      %1765 = vmatpush1.bf16.msra.mxu0 0
      %1766 = vmatprep.subr.bf16.mxu0 0
      %1767 = vmatpush1.bf16.msra.mxu0 0
      %1768 = vmatprep.subr.bf16.mxu0 0
      %1769 = vmatpush1.bf16.msra.mxu0 0
      %1770 = vmatprep.subr.bf16.mxu0 0
      %1771 = vmatpush1.bf16.msra.mxu0 0
      %1772 = vmatprep.subr.bf16.mxu0 0
      %1773 = vmatpush1.bf16.msra.mxu0 0
      %1774 = vmatprep.subr.bf16.mxu0 0
      %1775 = vmatpush1.bf16.msra.mxu0 0
      %1776 = vmatprep.mubr.bf16.mxu0 0
      %1777 = vmatmul.mubr.bf16.gmra.mrb[0].mxu0 %v1742
      %v1778 = vpop.f32.mrb[0].mxu0
      %v1779 = vadd.f32 0.0, %v1778
      %v1780 = vpop.f32.mrb[0].mxu0
      %v1781 = vpop.f32.mrb[0].mxu0
      %v1782 = vpop.f32.mrb[0].mxu0
      %1783 = vdwg.mxu0
      %v1784 = vadd.f32 %v1722, %v1779
      %v1785 = vld [vmem:[%s6] sm:$0x1]
      %v1787 = vlaneseq
      %v1788 = vshrl.u32 %v1787, 7
      %v1789 = vsub.s32 0, %v1788
      %v1790 = vrot.slane %v1785, %v1789
      %v1792 = vadd.f32 %v1784, %v1790
      %1793 = vst [vmem:[%s312] sm:$0xff] %v1792
      %p1794 = scmp.lt.s32.totalorder %s22, 1
      %s1795 = scalar_select %p1794, %s22, 1
      %p1796 = scmp.lt.s32.totalorder %s23, 0
      %s1797 = scalar_select %p1796, %s23, 0
      %s1798 = sadd.s32 %s1797, %s1795
      %s1799 = smul.addr %s1798, 8
      %s1800 = scalar_lea.vmem %s7, %s1799
      // Predicated region
      $region49: #{speech_embedding_forward.1} parent=47 // pred_check
        %p1801 = pneg %p204
      $region50: #{speech_embedding_forward.1} parent=47 // pred_check_branch
        %1803 = sbr.rel (%p1801) target = $region52
      $region51: #{speech_embedding_forward.1} parent=47 // pred_region
        _
      $region52: #{speech_embedding_forward.1} parent=47 // pred_fallthru
        _
    $region48: #{speech_embedding_forward.1} parent=5 // pred_fallthru
      _
    %p1804 = scmp.le.s32.totalorder 2, %s13
    // Predicated region
    $region53: #{speech_embedding_forward.1} parent=5 // pred_check
      %p1805 = pneg %p1804
    $region54: #{speech_embedding_forward.1} parent=5 // pred_check_branch
      %1807 = sbr.rel (%p1805) target = $region56
    $region55: #{speech_embedding_forward.1} parent=5 // pred_region
      %s1808 = ssub.s32 %s13, 2
      // Predicated region
      $region57: #{speech_embedding_forward.1} parent=55 // pred_check
        %p1809 = pneg %p210
      $region58: #{speech_embedding_forward.1} parent=55 // pred_check_branch
        %1811 = sbr.rel (%p1809) target = $region60
      $region59: #{speech_embedding_forward.1} parent=55 // pred_region
        %p1812 = scmp.lt.s32.totalorder %s24, 1
        %s1813 = scalar_select %p1812, %s24, 1
        %p1814 = scmp.lt.s32.totalorder %s25, 0
        %s1815 = scalar_select %p1814, %s25, 0
        %s1816 = sadd.s32 %s1815, %s1813
        %s1817 = smul.addr %s1816, 8
        %s1818 = scalar_lea.vmem %s7, %s1817
      $region60: #{speech_embedding_forward.1} parent=55 // pred_fallthru
        _
    $region56: #{speech_embedding_forward.1} parent=5 // pred_fallthru
      _
  $region6: #{speech_embedding_forward.1} parent=0 // loop_footer
    %s17 = sadd.s32 1, %s13
  $region7: #{speech_embedding_forward.1} parent=0 // loop_footer_branch
    %12 = sbr.rel target = $region3
  $region8: #{speech_embedding_forward.1} parent=0 // loop_exit
    _

</llo_original>
